<compile_context>
chip_gen: v6e
topology: v6e:2x2x1
jax: 0.10.0
libtpu: 0.0.40
codegen_flags: <defaults>
</compile_context>

<pallas_src>
import functools
import jax
import jax.numpy as jnp
from jax import lax
from jax.experimental import pallas as pl
from jax.experimental.pallas import tpu as pltpu

LN_EPS = 1e-5
BN_EPS = 1e-5
NORM_EPS = 1e-12

# rows of the packed [16, E] per-feature-vector slab
_R_MO_LN_G, _R_MO_LN_B, _R_MO_B = 0, 1, 2
_R_CAR_LN_G, _R_CAR_LN_B, _R_CAR_B = 3, 4, 5
_R_VIS_B, _R_VIS_BK_B = 6, 7
_R_LM_LN_G, _R_LM_LN_B, _R_LM_B1, _R_LM_B2 = 8, 9, 10, 11
_R_VM_B1, _R_VM_B2, _R_VM_BN_SCALE, _R_VM_BN_SHIFT = 12, 13, 14, 15


# ----------------------------------------------------------------------------- kernel
def _fused_forward_kernel(
    mo_hid_ref, car_hid_ref, crops_ref, motion_ref,        # data
    vec_ref,                                               # [16, E] packed vectors
    w_text_ref,                                            # [E, 2E]  (mo_w | car_w)
    w_vis_ref,                                             # [C, 2E]  (vis_w | vis_bk_w)
    w_m1_ref,                                              # [E, 2E]  (lm_w1 | vm_w1)
    w_m2_ref,                                              # [E, 2E]  (lm_w2 | vm_w2)
    vmerge_ref, lmerge_ref, vcar_ref, lcar_ref, vmo_ref, lmo_ref,   # outputs [B, E]
):
    B = crops_ref.shape[0]
    L = mo_hid_ref.shape[1]
    E = vec_ref.shape[1]

    v = vec_ref[...]                                       # [16, E]

    def row(i):                                            # [1, E]
        return v[i:i + 1, :]

    def layer_norm(x, g, b):
        mu = jnp.mean(x, axis=-1, keepdims=True)
        msq = jnp.mean(x * x, axis=-1, keepdims=True)
        var = jnp.maximum(msq - mu * mu, 0.0)
        return (x - mu) * lax.rsqrt(var + LN_EPS) * g + b

    def l2norm(x):
        s = jnp.sum(x * x, axis=-1, keepdims=True)
        return x * lax.rsqrt(jnp.maximum(s, NORM_EPS * NORM_EPS))

    # ---- text branch: mean over seq -> LayerNorm -> ReLU -> Linear  (both heads fused)
    inv_L = 1.0 / L
    x_mo = jnp.sum(mo_hid_ref[...], axis=1) * inv_L        # [B, E]
    x_car = jnp.sum(car_hid_ref[...], axis=1) * inv_L      # [B, E]
    r_mo = jnp.maximum(layer_norm(x_mo, row(_R_MO_LN_G), row(_R_MO_LN_B)), 0.0)
    r_car = jnp.maximum(layer_norm(x_car, row(_R_CAR_LN_G), row(_R_CAR_LN_B)), 0.0)

    xt = jnp.concatenate([r_mo, r_car], axis=0)            # [2B, E]
    yt = jnp.dot(xt, w_text_ref[...], preferred_element_type=jnp.float32)   # [2B, 2E]
    lang_mo = yt[:B, :E] + row(_R_MO_B)
    lang_car = yt[B:, E:] + row(_R_CAR_B)

    # ---- visual branch: 1x1 Conv2d on globally pooled features == Linear (both fused)
    xv = jnp.concatenate([crops_ref[...], motion_ref[...]], axis=0)          # [2B, C]
    yv = jnp.dot(xv, w_vis_ref[...], preferred_element_type=jnp.float32)     # [2B, 2E]
    vis_car = yv[:B, :E] + row(_R_VIS_B)
    vis_mo = yv[B:, E:] + row(_R_VIS_BK_B)

    # ---- merge heads (lang: LN->Linear->ReLU->Linear ; vis: Linear->BN->ReLU->Linear)
    lang_in = layer_norm(lang_car + lang_mo, row(_R_LM_LN_G), row(_R_LM_LN_B))
    vis_in = vis_car + vis_mo
    xm = jnp.concatenate([lang_in, vis_in], axis=0)                          # [2B, E]
    h = jnp.dot(xm, w_m1_ref[...], preferred_element_type=jnp.float32)       # [2B, 2E]
    h_lang = jnp.maximum(h[:B, :E] + row(_R_LM_B1), 0.0)
    h_vis = jnp.maximum((h[B:, E:] + row(_R_VM_B1)) * row(_R_VM_BN_SCALE)
                        + row(_R_VM_BN_SHIFT), 0.0)
    xm2 = jnp.concatenate([h_lang, h_vis], axis=0)                           # [2B, E]
    y2 = jnp.dot(xm2, w_m2_ref[...], preferred_element_type=jnp.float32)     # [2B, 2E]
    lang_merge = y2[:B, :E] + row(_R_LM_B2)
    vis_merge = y2[B:, E:] + row(_R_VM_B2)

    # ---- final L2 normalization, written straight to the six outputs
    vmerge_ref[...] = l2norm(vis_merge)
    lmerge_ref[...] = l2norm(lang_merge)
    vcar_ref[...] = l2norm(vis_car)
    lcar_ref[...] = l2norm(lang_car)
    vmo_ref[...] = l2norm(vis_mo)
    lmo_ref[...] = l2norm(lang_mo)


# ----------------------------------------------------------------------------- wrapper
def _fused_forward(packed, lang_mo_hidden, lang_car_hidden, crops_feat, motion_feat):
    B = lang_mo_hidden.shape[0]
    E = packed["vec"].shape[1]
    out_shape = tuple(jax.ShapeDtypeStruct((B, E), jnp.float32) for _ in range(6))
    vmem = pl.BlockSpec(memory_space=pltpu.MemorySpace.VMEM)
    return pl.pallas_call(
        _fused_forward_kernel,
        out_shape=out_shape,
        in_specs=[vmem] * 9,
        out_specs=tuple(vmem for _ in range(6)),
    )(lang_mo_hidden, lang_car_hidden, crops_feat, motion_feat,
      packed["vec"], packed["w_text"], packed["w_vis"], packed["w_m1"], packed["w_m2"])


# ----------------------------------------------------------------------------- params
def init_params(key, embed_dim, img_in_dim):
    ks = jax.random.split(key, 16)
    n = lambda k, s: (0.02 * jax.random.normal(k, s)).astype(jnp.float32)
    E, C = embed_dim, img_in_dim
    ar = jnp.arange(E, dtype=jnp.float32)
    return {
        "logit_scale": jnp.ones((), jnp.float32),
        # lang_mo_fc : LayerNorm(E) -> ReLU -> Linear(E, E)
        "mo_ln_g": jnp.ones((1, E), jnp.float32), "mo_ln_b": jnp.zeros((1, E), jnp.float32),
        "mo_w": n(ks[0], (E, E)), "mo_b": n(ks[1], (1, E)),
        # lang_car_fc
        "car_ln_g": jnp.ones((1, E), jnp.float32), "car_ln_b": jnp.zeros((1, E), jnp.float32),
        "car_w": n(ks[2], (E, E)), "car_b": n(ks[3], (1, E)),
        # domian_vis_fc / domian_vis_fc_bk : Conv2d(C, E, 1) stored as [C, E]
        "vis_w": n(ks[4], (C, E)), "vis_b": n(ks[5], (1, E)),
        "vis_bk_w": n(ks[6], (C, E)), "vis_bk_b": n(ks[7], (1, E)),
        # lang_fc_merge : LayerNorm -> Linear -> ReLU -> Linear
        "lm_ln_g": jnp.ones((1, E), jnp.float32), "lm_ln_b": jnp.zeros((1, E), jnp.float32),
        "lm_w1": n(ks[8], (E, E)), "lm_b1": n(ks[9], (1, E)),
        "lm_w2": n(ks[10], (E, E)), "lm_b2": n(ks[11], (1, E)),
        # vis_fc_merge : Linear -> BatchNorm1d(eval) -> ReLU -> Linear
        "vm_w1": n(ks[12], (E, E)), "vm_b1": n(ks[13], (1, E)),
        "vm_bn_g": (1.0 + 0.1 * jnp.cos(ar)).reshape(1, E),
        "vm_bn_b": (0.05 * jnp.sin(ar)).reshape(1, E),
        "vm_bn_m": (0.02 * jnp.sin(2.0 + ar)).reshape(1, E),
        "vm_bn_v": (1.0 + 0.1 * jnp.abs(jnp.sin(ar))).reshape(1, E),
        "vm_w2": n(ks[14], (E, E)), "vm_b2": n(ks[15], (1, E)),
    }


def pack_params(p):
    # fold BatchNorm1d (eval) into scale/shift and pack all (1,E) vectors into one slab
    bn_scale = p["vm_bn_g"] * lax.rsqrt(p["vm_bn_v"] + BN_EPS)
    bn_shift = p["vm_bn_b"] - p["vm_bn_m"] * bn_scale
    vec = jnp.concatenate(
        [p["mo_ln_g"], p["mo_ln_b"], p["mo_b"],
         p["car_ln_g"], p["car_ln_b"], p["car_b"],
         p["vis_b"], p["vis_bk_b"],
         p["lm_ln_g"], p["lm_ln_b"], p["lm_b1"], p["lm_b2"],
         p["vm_b1"], p["vm_b2"], bn_scale, bn_shift], axis=0)          # [16, E]
    return {
        "logit_scale": p["logit_scale"],
        "vec": vec,
        "w_text": jnp.concatenate([p["mo_w"], p["car_w"]], axis=1),     # [E, 2E]
        "w_vis": jnp.concatenate([p["vis_w"], p["vis_bk_w"]], axis=1),  # [C, 2E]
        "w_m1": jnp.concatenate([p["lm_w1"], p["vm_w1"]], axis=1),      # [E, 2E]
        "w_m2": jnp.concatenate([p["lm_w2"], p["vm_w2"]], axis=1),      # [E, 2E]
    }


# ----------------------------------------------------------------------------- forward
@jax.jit
def forward(packed, lang_mo_hidden, lang_car_hidden, crops_feat_nchw, motion_feat_nchw):
    B = lang_mo_hidden.shape[0]
    # NCHW [B, C, 1, 1] -> [B, C]  (metadata reshape only)
    crops_feat = crops_feat_nchw.reshape(B, -1)
    motion_feat = motion_feat_nchw.reshape(B, -1)

    (visual_merge_embeds, lang_merge_embeds, visual_car_embeds,
     lang_car_embeds, visual_mo_embeds, lang_mo_embeds) = _fused_forward(
        packed, lang_mo_hidden, lang_car_hidden, crops_feat, motion_feat)

    return {
        "pairs": [
            (visual_car_embeds, lang_car_embeds),
            (visual_mo_embeds, lang_mo_embeds),
            (visual_merge_embeds, lang_merge_embeds),
        ],
        "logit_scale": packed["logit_scale"],
        "cls_logits": [],   # eval mode -> training-only classifier heads skipped
    }


# ----------------------------------------------------------------------------- main
if __name__ == "__main__":
    B, L, E, C_IMG = 8, 8, 128, 256   # small synthetic: EMBED_DIM=128, img_in_dim=256

    key = jax.random.PRNGKey(0)
    k_p, k1, k2, k3, k4 = jax.random.split(key, 5)
    raw_params = init_params(k_p, E, C_IMG)
    packed = pack_params(raw_params)

    lang_mo_hidden = jax.random.normal(k1, (B, L, E), jnp.float32)    # BERT last_hidden_state (mo)
    lang_car_hidden = jax.random.normal(k2, (B, L, E), jnp.float32)   # BERT last_hidden_state (car)
    crops_feat = jax.random.normal(k3, (B, C_IMG, 1, 1), jnp.float32)   # vis_backbone(crops), NCHW
    motion_feat = jax.random.normal(k4, (B, C_IMG, 1, 1), jnp.float32)  # vis_backbone_bk(motion)

    out = forward(packed, lang_mo_hidden, lang_car_hidden, crops_feat, motion_feat)
    jax.block_until_ready(out)

    # sanity: each embedding is unit-norm and finite
    for v, l in out["pairs"]:
        assert v.shape == (B, E) and l.shape == (B, E)
        assert bool(jnp.all(jnp.isfinite(v))) and bool(jnp.all(jnp.isfinite(l)))
        assert bool(jnp.allclose(jnp.linalg.norm(v, axis=-1), 1.0, atol=1e-4))
        assert bool(jnp.allclose(jnp.linalg.norm(l, axis=-1), 1.0, atol=1e-4))

    print("KERNEL_OK")
</pallas_src>

<mosaic_0001>
module attributes {stable_mosaic.version = 11 : i64} {
  func.func @_fused_forward_kernel(%arg0: memref<8x8x128xf32, #tpu.memory_space<vmem>>, %arg1: memref<8x8x128xf32, #tpu.memory_space<vmem>>, %arg2: memref<8x256xf32, #tpu.memory_space<vmem>>, %arg3: memref<8x256xf32, #tpu.memory_space<vmem>>, %arg4: memref<16x128xf32, #tpu.memory_space<vmem>>, %arg5: memref<128x256xf32, #tpu.memory_space<vmem>>, %arg6: memref<256x256xf32, #tpu.memory_space<vmem>>, %arg7: memref<128x256xf32, #tpu.memory_space<vmem>>, %arg8: memref<128x256xf32, #tpu.memory_space<vmem>>, %arg9: memref<8x128xf32, #tpu.memory_space<vmem>>, %arg10: memref<8x128xf32, #tpu.memory_space<vmem>>, %arg11: memref<8x128xf32, #tpu.memory_space<vmem>>, %arg12: memref<8x128xf32, #tpu.memory_space<vmem>>, %arg13: memref<8x128xf32, #tpu.memory_space<vmem>>, %arg14: memref<8x128xf32, #tpu.memory_space<vmem>>) attributes {dimension_semantics = [], scalar_prefetch = 0 : i64, scratch_operands = 0 : i64, tpu.core_type = #tpu.core_type<tc>} {
    %c0 = arith.constant 0 : index
    %c0_0 = arith.constant 0 : index
    %0 = vector.load %arg4[%c0, %c0_0] : memref<16x128xf32, #tpu.memory_space<vmem>>, vector<16x128xf32>
    %c0_1 = arith.constant 0 : index
    %c0_2 = arith.constant 0 : index
    %c0_3 = arith.constant 0 : index
    %1 = vector.load %arg0[%c0_1, %c0_2, %c0_3] : memref<8x8x128xf32, #tpu.memory_space<vmem>>, vector<8x8x128xf32>
    %cst = arith.constant dense<0.000000e+00> : vector<8x128xf32>
    %2 = vector.multi_reduction <add>, %1, %cst [1] : vector<8x8x128xf32> to vector<8x128xf32>
    %cst_4 = arith.constant 1.250000e-01 : f32
    %3 = vector.broadcast %cst_4 : f32 to vector<8x128xf32>
    %4 = arith.mulf %2, %3 : vector<8x128xf32>
    %c0_5 = arith.constant 0 : index
    %c0_6 = arith.constant 0 : index
    %c0_7 = arith.constant 0 : index
    %5 = vector.load %arg1[%c0_5, %c0_6, %c0_7] : memref<8x8x128xf32, #tpu.memory_space<vmem>>, vector<8x8x128xf32>
    %cst_8 = arith.constant dense<0.000000e+00> : vector<8x128xf32>
    %6 = vector.multi_reduction <add>, %5, %cst_8 [1] : vector<8x8x128xf32> to vector<8x128xf32>
    %cst_9 = arith.constant 1.250000e-01 : f32
    %7 = vector.broadcast %cst_9 : f32 to vector<8x128xf32>
    %8 = arith.mulf %6, %7 : vector<8x128xf32>
    %9 = vector.extract_strided_slice %0 {offsets = [0, 0], sizes = [1, 128], strides = [1, 1]} : vector<16x128xf32> to vector<1x128xf32>
    %10 = vector.extract_strided_slice %0 {offsets = [1, 0], sizes = [1, 128], strides = [1, 1]} : vector<16x128xf32> to vector<1x128xf32>
    %cst_10 = arith.constant dense<0.000000e+00> : vector<8xf32>
    %11 = vector.multi_reduction <add>, %4, %cst_10 [1] : vector<8x128xf32> to vector<8xf32>
    %12 = vector.shape_cast %11 : vector<8xf32> to vector<8x1xf32>
    %cst_11 = arith.constant 1.280000e+02 : f32
    %13 = vector.broadcast %cst_11 : f32 to vector<8x1xf32>
    %14 = arith.divf %12, %13 : vector<8x1xf32>
    %15 = arith.mulf %4, %4 : vector<8x128xf32>
    %cst_12 = arith.constant dense<0.000000e+00> : vector<8xf32>
    %16 = vector.multi_reduction <add>, %15, %cst_12 [1] : vector<8x128xf32> to vector<8xf32>
    %17 = vector.shape_cast %16 : vector<8xf32> to vector<8x1xf32>
    %cst_13 = arith.constant 1.280000e+02 : f32
    %18 = vector.broadcast %cst_13 : f32 to vector<8x1xf32>
    %19 = arith.divf %17, %18 : vector<8x1xf32>
    %20 = arith.mulf %14, %14 : vector<8x1xf32>
    %21 = arith.subf %19, %20 : vector<8x1xf32>
    %cst_14 = arith.constant 0.000000e+00 : f32
    %22 = vector.broadcast %cst_14 : f32 to vector<8x1xf32>
    %23 = arith.maximumf %21, %22 : vector<8x1xf32>
    %24 = vector.broadcast %14 : vector<8x1xf32> to vector<8x128xf32>
    %25 = arith.subf %4, %24 : vector<8x128xf32>
    %cst_15 = arith.constant 9.99999974E-6 : f32
    %26 = vector.broadcast %cst_15 : f32 to vector<8x1xf32>
    %27 = arith.addf %23, %26 : vector<8x1xf32>
    %28 = math.rsqrt %27 : vector<8x1xf32>
    %29 = vector.broadcast %28 : vector<8x1xf32> to vector<8x128xf32>
    %30 = arith.mulf %25, %29 : vector<8x128xf32>
    %31 = vector.broadcast %9 : vector<1x128xf32> to vector<8x128xf32>
    %32 = arith.mulf %30, %31 : vector<8x128xf32>
    %33 = vector.broadcast %10 : vector<1x128xf32> to vector<8x128xf32>
    %34 = arith.addf %32, %33 : vector<8x128xf32>
    %cst_16 = arith.constant 0.000000e+00 : f32
    %35 = vector.broadcast %cst_16 : f32 to vector<8x128xf32>
    %36 = arith.maximumf %34, %35 : vector<8x128xf32>
    %37 = vector.extract_strided_slice %0 {offsets = [3, 0], sizes = [1, 128], strides = [1, 1]} : vector<16x128xf32> to vector<1x128xf32>
    %38 = vector.extract_strided_slice %0 {offsets = [4, 0], sizes = [1, 128], strides = [1, 1]} : vector<16x128xf32> to vector<1x128xf32>
    %cst_17 = arith.constant dense<0.000000e+00> : vector<8xf32>
    %39 = vector.multi_reduction <add>, %8, %cst_17 [1] : vector<8x128xf32> to vector<8xf32>
    %40 = vector.shape_cast %39 : vector<8xf32> to vector<8x1xf32>
    %cst_18 = arith.constant 1.280000e+02 : f32
    %41 = vector.broadcast %cst_18 : f32 to vector<8x1xf32>
    %42 = arith.divf %40, %41 : vector<8x1xf32>
    %43 = arith.mulf %8, %8 : vector<8x128xf32>
    %cst_19 = arith.constant dense<0.000000e+00> : vector<8xf32>
    %44 = vector.multi_reduction <add>, %43, %cst_19 [1] : vector<8x128xf32> to vector<8xf32>
    %45 = vector.shape_cast %44 : vector<8xf32> to vector<8x1xf32>
    %cst_20 = arith.constant 1.280000e+02 : f32
    %46 = vector.broadcast %cst_20 : f32 to vector<8x1xf32>
    %47 = arith.divf %45, %46 : vector<8x1xf32>
    %48 = arith.mulf %42, %42 : vector<8x1xf32>
    %49 = arith.subf %47, %48 : vector<8x1xf32>
    %cst_21 = arith.constant 0.000000e+00 : f32
    %50 = vector.broadcast %cst_21 : f32 to vector<8x1xf32>
    %51 = arith.maximumf %49, %50 : vector<8x1xf32>
    %52 = vector.broadcast %42 : vector<8x1xf32> to vector<8x128xf32>
    %53 = arith.subf %8, %52 : vector<8x128xf32>
    %cst_22 = arith.constant 9.99999974E-6 : f32
    %54 = vector.broadcast %cst_22 : f32 to vector<8x1xf32>
    %55 = arith.addf %51, %54 : vector<8x1xf32>
    %56 = math.rsqrt %55 : vector<8x1xf32>
    %57 = vector.broadcast %56 : vector<8x1xf32> to vector<8x128xf32>
    %58 = arith.mulf %53, %57 : vector<8x128xf32>
    %59 = vector.broadcast %37 : vector<1x128xf32> to vector<8x128xf32>
    %60 = arith.mulf %58, %59 : vector<8x128xf32>
    %61 = vector.broadcast %38 : vector<1x128xf32> to vector<8x128xf32>
    %62 = arith.addf %60, %61 : vector<8x128xf32>
    %cst_23 = arith.constant 0.000000e+00 : f32
    %63 = vector.broadcast %cst_23 : f32 to vector<8x128xf32>
    %64 = arith.maximumf %62, %63 : vector<8x128xf32>
    %65 = tpu.concatenate %36, %64 in 0 : vector<8x128xf32>, vector<8x128xf32> -> vector<16x128xf32>
    %c0_24 = arith.constant 0 : index
    %c0_25 = arith.constant 0 : index
    %66 = vector.load %arg5[%c0_24, %c0_25] : memref<128x256xf32, #tpu.memory_space<vmem>>, vector<128x256xf32>
    %cst_26 = arith.constant dense<0.000000e+00> : vector<16x256xf32>
    %67 = tpu.matmul %65, %66, %cst_26 {dimension_numbers = #tpu.dot_dimension_numbers<[1], [0], [0], [1], [0, 0, 1, 1], [], []>} : vector<16x128xf32>, vector<128x256xf32>, vector<16x256xf32> -> vector<16x256xf32>
    %68 = vector.extract_strided_slice %67 {offsets = [0, 0], sizes = [8, 128], strides = [1, 1]} : vector<16x256xf32> to vector<8x128xf32>
    %69 = vector.extract_strided_slice %0 {offsets = [2, 0], sizes = [1, 128], strides = [1, 1]} : vector<16x128xf32> to vector<1x128xf32>
    %70 = vector.broadcast %69 : vector<1x128xf32> to vector<8x128xf32>
    %71 = arith.addf %68, %70 : vector<8x128xf32>
    %72 = vector.extract_strided_slice %67 {offsets = [8, 128], sizes = [8, 128], strides = [1, 1]} : vector<16x256xf32> to vector<8x128xf32>
    %73 = vector.extract_strided_slice %0 {offsets = [5, 0], sizes = [1, 128], strides = [1, 1]} : vector<16x128xf32> to vector<1x128xf32>
    %74 = vector.broadcast %73 : vector<1x128xf32> to vector<8x128xf32>
    %75 = arith.addf %72, %74 : vector<8x128xf32>
    %c0_27 = arith.constant 0 : index
    %c0_28 = arith.constant 0 : index
    %76 = vector.load %arg2[%c0_27, %c0_28] : memref<8x256xf32, #tpu.memory_space<vmem>>, vector<8x256xf32>
    %c0_29 = arith.constant 0 : index
    %c0_30 = arith.constant 0 : index
    %77 = vector.load %arg3[%c0_29, %c0_30] : memref<8x256xf32, #tpu.memory_space<vmem>>, vector<8x256xf32>
    %78 = tpu.concatenate %76, %77 in 0 : vector<8x256xf32>, vector<8x256xf32> -> vector<16x256xf32>
    %c0_31 = arith.constant 0 : index
    %c0_32 = arith.constant 0 : index
    %79 = vector.load %arg6[%c0_31, %c0_32] : memref<256x256xf32, #tpu.memory_space<vmem>>, vector<256x256xf32>
    %cst_33 = arith.constant dense<0.000000e+00> : vector<16x256xf32>
    %80 = tpu.matmul %78, %79, %cst_33 {dimension_numbers = #tpu.dot_dimension_numbers<[1], [0], [0], [1], [0, 0, 1, 1], [], []>} : vector<16x256xf32>, vector<256x256xf32>, vector<16x256xf32> -> vector<16x256xf32>
    %81 = vector.extract_strided_slice %80 {offsets = [0, 0], sizes = [8, 128], strides = [1, 1]} : vector<16x256xf32> to vector<8x128xf32>
    %82 = vector.extract_strided_slice %0 {offsets = [6, 0], sizes = [1, 128], strides = [1, 1]} : vector<16x128xf32> to vector<1x128xf32>
    %83 = vector.broadcast %82 : vector<1x128xf32> to vector<8x128xf32>
    %84 = arith.addf %81, %83 : vector<8x128xf32>
    %85 = vector.extract_strided_slice %80 {offsets = [8, 128], sizes = [8, 128], strides = [1, 1]} : vector<16x256xf32> to vector<8x128xf32>
    %86 = vector.extract_strided_slice %0 {offsets = [7, 0], sizes = [1, 128], strides = [1, 1]} : vector<16x128xf32> to vector<1x128xf32>
    %87 = vector.broadcast %86 : vector<1x128xf32> to vector<8x128xf32>
    %88 = arith.addf %85, %87 : vector<8x128xf32>
    %89 = arith.addf %75, %71 : vector<8x128xf32>
    %90 = vector.extract_strided_slice %0 {offsets = [8, 0], sizes = [1, 128], strides = [1, 1]} : vector<16x128xf32> to vector<1x128xf32>
    %91 = vector.extract_strided_slice %0 {offsets = [9, 0], sizes = [1, 128], strides = [1, 1]} : vector<16x128xf32> to vector<1x128xf32>
    %cst_34 = arith.constant dense<0.000000e+00> : vector<8xf32>
    %92 = vector.multi_reduction <add>, %89, %cst_34 [1] : vector<8x128xf32> to vector<8xf32>
    %93 = vector.shape_cast %92 : vector<8xf32> to vector<8x1xf32>
    %cst_35 = arith.constant 1.280000e+02 : f32
    %94 = vector.broadcast %cst_35 : f32 to vector<8x1xf32>
    %95 = arith.divf %93, %94 : vector<8x1xf32>
    %96 = arith.mulf %89, %89 : vector<8x128xf32>
    %cst_36 = arith.constant dense<0.000000e+00> : vector<8xf32>
    %97 = vector.multi_reduction <add>, %96, %cst_36 [1] : vector<8x128xf32> to vector<8xf32>
    %98 = vector.shape_cast %97 : vector<8xf32> to vector<8x1xf32>
    %cst_37 = arith.constant 1.280000e+02 : f32
    %99 = vector.broadcast %cst_37 : f32 to vector<8x1xf32>
    %100 = arith.divf %98, %99 : vector<8x1xf32>
    %101 = arith.mulf %95, %95 : vector<8x1xf32>
    %102 = arith.subf %100, %101 : vector<8x1xf32>
    %cst_38 = arith.constant 0.000000e+00 : f32
    %103 = vector.broadcast %cst_38 : f32 to vector<8x1xf32>
    %104 = arith.maximumf %102, %103 : vector<8x1xf32>
    %105 = vector.broadcast %95 : vector<8x1xf32> to vector<8x128xf32>
    %106 = arith.subf %89, %105 : vector<8x128xf32>
    %cst_39 = arith.constant 9.99999974E-6 : f32
    %107 = vector.broadcast %cst_39 : f32 to vector<8x1xf32>
    %108 = arith.addf %104, %107 : vector<8x1xf32>
    %109 = math.rsqrt %108 : vector<8x1xf32>
    %110 = vector.broadcast %109 : vector<8x1xf32> to vector<8x128xf32>
    %111 = arith.mulf %106, %110 : vector<8x128xf32>
    %112 = vector.broadcast %90 : vector<1x128xf32> to vector<8x128xf32>
    %113 = arith.mulf %111, %112 : vector<8x128xf32>
    %114 = vector.broadcast %91 : vector<1x128xf32> to vector<8x128xf32>
    %115 = arith.addf %113, %114 : vector<8x128xf32>
    %116 = arith.addf %84, %88 : vector<8x128xf32>
    %117 = tpu.concatenate %115, %116 in 0 : vector<8x128xf32>, vector<8x128xf32> -> vector<16x128xf32>
    %c0_40 = arith.constant 0 : index
    %c0_41 = arith.constant 0 : index
    %118 = vector.load %arg7[%c0_40, %c0_41] : memref<128x256xf32, #tpu.memory_space<vmem>>, vector<128x256xf32>
    %cst_42 = arith.constant dense<0.000000e+00> : vector<16x256xf32>
    %119 = tpu.matmul %117, %118, %cst_42 {dimension_numbers = #tpu.dot_dimension_numbers<[1], [0], [0], [1], [0, 0, 1, 1], [], []>} : vector<16x128xf32>, vector<128x256xf32>, vector<16x256xf32> -> vector<16x256xf32>
    %120 = vector.extract_strided_slice %119 {offsets = [0, 0], sizes = [8, 128], strides = [1, 1]} : vector<16x256xf32> to vector<8x128xf32>
    %121 = vector.extract_strided_slice %0 {offsets = [10, 0], sizes = [1, 128], strides = [1, 1]} : vector<16x128xf32> to vector<1x128xf32>
    %122 = vector.broadcast %121 : vector<1x128xf32> to vector<8x128xf32>
    %123 = arith.addf %120, %122 : vector<8x128xf32>
    %cst_43 = arith.constant 0.000000e+00 : f32
    %124 = vector.broadcast %cst_43 : f32 to vector<8x128xf32>
    %125 = arith.maximumf %123, %124 : vector<8x128xf32>
    %126 = vector.extract_strided_slice %119 {offsets = [8, 128], sizes = [8, 128], strides = [1, 1]} : vector<16x256xf32> to vector<8x128xf32>
    %127 = vector.extract_strided_slice %0 {offsets = [12, 0], sizes = [1, 128], strides = [1, 1]} : vector<16x128xf32> to vector<1x128xf32>
    %128 = vector.broadcast %127 : vector<1x128xf32> to vector<8x128xf32>
    %129 = arith.addf %126, %128 : vector<8x128xf32>
    %130 = vector.extract_strided_slice %0 {offsets = [14, 0], sizes = [1, 128], strides = [1, 1]} : vector<16x128xf32> to vector<1x128xf32>
    %131 = vector.broadcast %130 : vector<1x128xf32> to vector<8x128xf32>
    %132 = arith.mulf %129, %131 : vector<8x128xf32>
    %133 = vector.extract_strided_slice %0 {offsets = [15, 0], sizes = [1, 128], strides = [1, 1]} : vector<16x128xf32> to vector<1x128xf32>
    %134 = vector.broadcast %133 : vector<1x128xf32> to vector<8x128xf32>
    %135 = arith.addf %132, %134 : vector<8x128xf32>
    %cst_44 = arith.constant 0.000000e+00 : f32
    %136 = vector.broadcast %cst_44 : f32 to vector<8x128xf32>
    %137 = arith.maximumf %135, %136 : vector<8x128xf32>
    %138 = tpu.concatenate %125, %137 in 0 : vector<8x128xf32>, vector<8x128xf32> -> vector<16x128xf32>
    %c0_45 = arith.constant 0 : index
    %c0_46 = arith.constant 0 : index
    %139 = vector.load %arg8[%c0_45, %c0_46] : memref<128x256xf32, #tpu.memory_space<vmem>>, vector<128x256xf32>
    %cst_47 = arith.constant dense<0.000000e+00> : vector<16x256xf32>
    %140 = tpu.matmul %138, %139, %cst_47 {dimension_numbers = #tpu.dot_dimension_numbers<[1], [0], [0], [1], [0, 0, 1, 1], [], []>} : vector<16x128xf32>, vector<128x256xf32>, vector<16x256xf32> -> vector<16x256xf32>
    %141 = vector.extract_strided_slice %140 {offsets = [0, 0], sizes = [8, 128], strides = [1, 1]} : vector<16x256xf32> to vector<8x128xf32>
    %142 = vector.extract_strided_slice %0 {offsets = [11, 0], sizes = [1, 128], strides = [1, 1]} : vector<16x128xf32> to vector<1x128xf32>
    %143 = vector.broadcast %142 : vector<1x128xf32> to vector<8x128xf32>
    %144 = arith.addf %141, %143 : vector<8x128xf32>
    %145 = vector.extract_strided_slice %140 {offsets = [8, 128], sizes = [8, 128], strides = [1, 1]} : vector<16x256xf32> to vector<8x128xf32>
    %146 = vector.extract_strided_slice %0 {offsets = [13, 0], sizes = [1, 128], strides = [1, 1]} : vector<16x128xf32> to vector<1x128xf32>
    %147 = vector.broadcast %146 : vector<1x128xf32> to vector<8x128xf32>
    %148 = arith.addf %145, %147 : vector<8x128xf32>
    %149 = arith.mulf %148, %148 : vector<8x128xf32>
    %cst_48 = arith.constant dense<0.000000e+00> : vector<8xf32>
    %150 = vector.multi_reduction <add>, %149, %cst_48 [1] : vector<8x128xf32> to vector<8xf32>
    %151 = vector.shape_cast %150 : vector<8xf32> to vector<8x1xf32>
    %cst_49 = arith.constant 1.000000e-24 : f32
    %152 = vector.broadcast %cst_49 : f32 to vector<8x1xf32>
    %153 = arith.maximumf %151, %152 : vector<8x1xf32>
    %154 = math.rsqrt %153 : vector<8x1xf32>
    %155 = vector.broadcast %154 : vector<8x1xf32> to vector<8x128xf32>
    %156 = arith.mulf %148, %155 : vector<8x128xf32>
    %c0_50 = arith.constant 0 : index
    %c0_51 = arith.constant 0 : index
    %157 = vector.load %arg9[%c0_50, %c0_51] : memref<8x128xf32, #tpu.memory_space<vmem>>, vector<8x128xf32>
    tpu.vector_store %arg9[%c0_50, %c0_51], %156 {strides = array<i32>} : memref<8x128xf32, #tpu.memory_space<vmem>>, vector<8x128xf32>,
    %158 = arith.mulf %144, %144 : vector<8x128xf32>
    %cst_52 = arith.constant dense<0.000000e+00> : vector<8xf32>
    %159 = vector.multi_reduction <add>, %158, %cst_52 [1] : vector<8x128xf32> to vector<8xf32>
    %160 = vector.shape_cast %159 : vector<8xf32> to vector<8x1xf32>
    %cst_53 = arith.constant 1.000000e-24 : f32
    %161 = vector.broadcast %cst_53 : f32 to vector<8x1xf32>
    %162 = arith.maximumf %160, %161 : vector<8x1xf32>
    %163 = math.rsqrt %162 : vector<8x1xf32>
    %164 = vector.broadcast %163 : vector<8x1xf32> to vector<8x128xf32>
    %165 = arith.mulf %144, %164 : vector<8x128xf32>
    %c0_54 = arith.constant 0 : index
    %c0_55 = arith.constant 0 : index
    %166 = vector.load %arg10[%c0_54, %c0_55] : memref<8x128xf32, #tpu.memory_space<vmem>>, vector<8x128xf32>
    tpu.vector_store %arg10[%c0_54, %c0_55], %165 {strides = array<i32>} : memref<8x128xf32, #tpu.memory_space<vmem>>, vector<8x128xf32>,
    %167 = arith.mulf %84, %84 : vector<8x128xf32>
    %cst_56 = arith.constant dense<0.000000e+00> : vector<8xf32>
    %168 = vector.multi_reduction <add>, %167, %cst_56 [1] : vector<8x128xf32> to vector<8xf32>
    %169 = vector.shape_cast %168 : vector<8xf32> to vector<8x1xf32>
    %cst_57 = arith.constant 1.000000e-24 : f32
    %170 = vector.broadcast %cst_57 : f32 to vector<8x1xf32>
    %171 = arith.maximumf %169, %170 : vector<8x1xf32>
    %172 = math.rsqrt %171 : vector<8x1xf32>
    %173 = vector.broadcast %172 : vector<8x1xf32> to vector<8x128xf32>
    %174 = arith.mulf %84, %173 : vector<8x128xf32>
    %c0_58 = arith.constant 0 : index
    %c0_59 = arith.constant 0 : index
    %175 = vector.load %arg11[%c0_58, %c0_59] : memref<8x128xf32, #tpu.memory_space<vmem>>, vector<8x128xf32>
    tpu.vector_store %arg11[%c0_58, %c0_59], %174 {strides = array<i32>} : memref<8x128xf32, #tpu.memory_space<vmem>>, vector<8x128xf32>,
    %176 = arith.mulf %75, %75 : vector<8x128xf32>
    %cst_60 = arith.constant dense<0.000000e+00> : vector<8xf32>
    %177 = vector.multi_reduction <add>, %176, %cst_60 [1] : vector<8x128xf32> to vector<8xf32>
    %178 = vector.shape_cast %177 : vector<8xf32> to vector<8x1xf32>
    %cst_61 = arith.constant 1.000000e-24 : f32
    %179 = vector.broadcast %cst_61 : f32 to vector<8x1xf32>
    %180 = arith.maximumf %178, %179 : vector<8x1xf32>
    %181 = math.rsqrt %180 : vector<8x1xf32>
    %182 = vector.broadcast %181 : vector<8x1xf32> to vector<8x128xf32>
    %183 = arith.mulf %75, %182 : vector<8x128xf32>
    %c0_62 = arith.constant 0 : index
    %c0_63 = arith.constant 0 : index
    %184 = vector.load %arg12[%c0_62, %c0_63] : memref<8x128xf32, #tpu.memory_space<vmem>>, vector<8x128xf32>
    tpu.vector_store %arg12[%c0_62, %c0_63], %183 {strides = array<i32>} : memref<8x128xf32, #tpu.memory_space<vmem>>, vector<8x128xf32>,
    %185 = arith.mulf %88, %88 : vector<8x128xf32>
    %cst_64 = arith.constant dense<0.000000e+00> : vector<8xf32>
    %186 = vector.multi_reduction <add>, %185, %cst_64 [1] : vector<8x128xf32> to vector<8xf32>
    %187 = vector.shape_cast %186 : vector<8xf32> to vector<8x1xf32>
    %cst_65 = arith.constant 1.000000e-24 : f32
    %188 = vector.broadcast %cst_65 : f32 to vector<8x1xf32>
    %189 = arith.maximumf %187, %188 : vector<8x1xf32>
    %190 = math.rsqrt %189 : vector<8x1xf32>
    %191 = vector.broadcast %190 : vector<8x1xf32> to vector<8x128xf32>
    %192 = arith.mulf %88, %191 : vector<8x128xf32>
    %c0_66 = arith.constant 0 : index
    %c0_67 = arith.constant 0 : index
    %193 = vector.load %arg13[%c0_66, %c0_67] : memref<8x128xf32, #tpu.memory_space<vmem>>, vector<8x128xf32>
    tpu.vector_store %arg13[%c0_66, %c0_67], %192 {strides = array<i32>} : memref<8x128xf32, #tpu.memory_space<vmem>>, vector<8x128xf32>,
    %194 = arith.mulf %71, %71 : vector<8x128xf32>
    %cst_68 = arith.constant dense<0.000000e+00> : vector<8xf32>
    %195 = vector.multi_reduction <add>, %194, %cst_68 [1] : vector<8x128xf32> to vector<8xf32>
    %196 = vector.shape_cast %195 : vector<8xf32> to vector<8x1xf32>
    %cst_69 = arith.constant 1.000000e-24 : f32
    %197 = vector.broadcast %cst_69 : f32 to vector<8x1xf32>
    %198 = arith.maximumf %196, %197 : vector<8x1xf32>
    %199 = math.rsqrt %198 : vector<8x1xf32>
    %200 = vector.broadcast %199 : vector<8x1xf32> to vector<8x128xf32>
    %201 = arith.mulf %71, %200 : vector<8x128xf32>
    %c0_70 = arith.constant 0 : index
    %c0_71 = arith.constant 0 : index
    %202 = vector.load %arg14[%c0_70, %c0_71] : memref<8x128xf32, #tpu.memory_space<vmem>>, vector<8x128xf32>
    tpu.vector_store %arg14[%c0_70, %c0_71], %201 {strides = array<i32>} : memref<8x128xf32, #tpu.memory_space<vmem>>, vector<8x128xf32>,
    return
  }
}

</mosaic_0001>

<llo_original>
// kernel: forward.1
$region0: #{forward.1}
  #allocation0 [shape = 'u32[]', space=smem, size = 0x4, offset = 0x4, fixed_abs, tag = 'smem constant byte address 0x4 - core index']
  #allocation1 [shape = 'u32[144,128]{1,0:T(1,128)}', space=vmem, size = 0x12000, scoped, tag = 'internal scratch']
  %s0 = inlined_call_operand.vmem [shape: f32[8,8,128], index: 0, kind: input, shape index: {}]
  %s1 = inlined_call_operand.hbm [shape: f32[8,8,128], index: 1, kind: input, shape index: {}]
  %s2 = inlined_call_operand.vmem [shape: f32[8,256], index: 2, kind: input, shape index: {}]
  %s3 = inlined_call_operand.vmem [shape: f32[8,256], index: 3, kind: input, shape index: {}]
  %s4 = inlined_call_operand.hbm [shape: f32[16,128], index: 4, kind: input, shape index: {}]
  %s5 = inlined_call_operand.hbm [shape: f32[128,256], index: 5, kind: input, shape index: {}]
  %s6 = inlined_call_operand.hbm [shape: f32[256,256], index: 6, kind: input, shape index: {}]
  %s7 = inlined_call_operand.hbm [shape: f32[128,256], index: 7, kind: input, shape index: {}]
  %s8 = inlined_call_operand.hbm [shape: f32[128,256], index: 8, kind: input, shape index: {}]
  %s9 = inlined_call_operand.hbm [shape: f32[8,128], index: 9, kind: output, shape index: {0}]
  %s10 = inlined_call_operand.hbm [shape: f32[8,128], index: 10, kind: output, shape index: {1}]
  %s11 = inlined_call_operand.hbm [shape: f32[8,128], index: 11, kind: output, shape index: {2}]
  %s12 = inlined_call_operand.hbm [shape: f32[8,128], index: 12, kind: output, shape index: {3}]
  %s13 = inlined_call_operand.hbm [shape: f32[8,128], index: 13, kind: output, shape index: {4}]
  %s14 = inlined_call_operand.hbm [shape: f32[8,128], index: 14, kind: output, shape index: {5}]
  %15 = xla_tuple %s9, %s10, %s11, %s12, %s13, %s14
  %s16 = sld [smem:[#allocation0]]
  $region110: #{forward.1} parent=0
    _
  %s18 = ssub.s32 1, %s16
  %s19 = scalar_select 0, %s18, %s16
  $region1: #{forward.1} parent=0
    #allocation2 [shape = 'u8[32768]{0}', space=vmem, size = 0x8000, scoped, tag = 'input window, operand 1, single buffered']
    #allocation3 [shape = 's32[1]{0}', space=sflag, size = 0x4, scoped, tag = 'scoped memory for forward.1']
    #allocation4 [shape = 's32[1]{0}', space=sflag, size = 0x4, scoped, tag = 'scoped memory for forward.1']
    #allocation5 [shape = 'u8[8192]{0}', space=vmem, size = 0x2000, scoped, tag = 'input window, operand 4, single buffered']
    #allocation6 [shape = 's32[1]{0}', space=sflag, size = 0x4, scoped, tag = 'scoped memory for forward.1']
    #allocation7 [shape = 'u8[131072]{0}', space=vmem, size = 0x20000, scoped, tag = 'input window, operand 5, single buffered']
    #allocation8 [shape = 'u8[262144]{0}', space=vmem, size = 0x40000, scoped, tag = 'input window, operand 6, single buffered']
    #allocation9 [shape = 's32[1]{0}', space=sflag, size = 0x4, scoped, tag = 'scoped memory for forward.1']
    #allocation10 [shape = 'u8[131072]{0}', space=vmem, size = 0x20000, scoped, tag = 'input window, operand 7, single buffered']
    #allocation11 [shape = 'u8[131072]{0}', space=vmem, size = 0x20000, scoped, tag = 'input window, operand 8, single buffered']
    #allocation12 [shape = 's32[1]{0}', space=sflag, size = 0x4, scoped, tag = 'scoped memory for forward.1']
    #allocation13 [shape = 'u8[4096]{0}', space=vmem, size = 0x1000, scoped, tag = 'output window, operand 0, single buffered']
    #allocation14 [shape = 'u8[4096]{0}', space=vmem, size = 0x1000, scoped, tag = 'output window, operand 1, single buffered']
    #allocation15 [shape = 's32[1]{0}', space=sflag, size = 0x4, scoped, tag = 'scoped memory for forward.1']
    #allocation16 [shape = 'u8[4096]{0}', space=vmem, size = 0x1000, scoped, tag = 'output window, operand 2, single buffered']
    #allocation17 [shape = 'u8[4096]{0}', space=vmem, size = 0x1000, scoped, tag = 'output window, operand 3, single buffered']
    #allocation18 [shape = 's32[1]{0}', space=sflag, size = 0x4, scoped, tag = 'scoped memory for forward.1']
    #allocation19 [shape = 'u8[4096]{0}', space=vmem, size = 0x1000, scoped, tag = 'output window, operand 4, single buffered']
    #allocation20 [shape = 'u8[4096]{0}', space=vmem, size = 0x1000, scoped, tag = 'output window, operand 5, single buffered']
    #allocation21 [shape = 's32[1]{0}', space=sflag, size = 0x4, scoped, tag = 'scoped memory for forward.1']
    %20 = vsyncpa [#allocation3], 0
    %21 = vsyncpa [#allocation6], 0
    %22 = vsyncpa [#allocation9], 0
    %23 = vsyncpa [#allocation12], 0
    %24 = vsyncpa [#allocation4], 0
    %25 = vsyncpa [#allocation15], 0
    %26 = vsyncpa [#allocation18], 0
    %27 = vsyncpa [#allocation21], 0
    // Predicated region
    $region2: #{forward.1} parent=1 // pred_check
      _
    $region3: #{forward.1} parent=1 // pred_check_branch
      %29 = sbr.rel (0) target = $region5
    $region4: #{forward.1} parent=1 // pred_region
      _
    $region5: #{forward.1} parent=1 // pred_fallthru
      _
    // Predicated region
    $region6: #{forward.1} parent=1 // pred_check
      _
    $region7: #{forward.1} parent=1 // pred_check_branch
      %31 = sbr.rel (0) target = $region9
    $region8: #{forward.1} parent=1 // pred_region
      %s33 = ssub.s32 1024, 1024
      %34 = vsyncadd [#allocation3], %s33
      %s35 = sshll.u32 [#allocation2], 4
      %s36 = int_to_ptr.vmem [resolvable:$true] %s35
      %41 = dma.hbm_to_vmem [thread:$0]  %s1, 1024, %s36, [#allocation3], 128, 128, 8
    $region9: #{forward.1} parent=1 // pred_fallthru
      _
    // Predicated region
    $region10: #{forward.1} parent=1 // pred_check
      _
    $region11: #{forward.1} parent=1 // pred_check_branch
      %43 = sbr.rel (0) target = $region13
    $region12: #{forward.1} parent=1 // pred_region
      _
    $region13: #{forward.1} parent=1 // pred_fallthru
      _
    // Predicated region
    $region14: #{forward.1} parent=1 // pred_check
      _
    $region15: #{forward.1} parent=1 // pred_check_branch
      %45 = sbr.rel (0) target = $region17
    $region16: #{forward.1} parent=1 // pred_region
      _
    $region17: #{forward.1} parent=1 // pred_fallthru
      _
    // Predicated region
    $region18: #{forward.1} parent=1 // pred_check
      _
    $region19: #{forward.1} parent=1 // pred_check_branch
      %47 = sbr.rel (0) target = $region21
    $region20: #{forward.1} parent=1 // pred_region
      %s49 = ssub.s32 256, 256
      %50 = vsyncadd [#allocation6], %s49
      %s51 = sshll.u32 [#allocation5], 4
      %s52 = int_to_ptr.vmem [resolvable:$true] %s51
      %57 = dma.hbm_to_vmem [thread:$0]  %s4, 256, %s52, [#allocation6], 128, 128, 8
    $region21: #{forward.1} parent=1 // pred_fallthru
      _
    // Predicated region
    $region22: #{forward.1} parent=1 // pred_check
      _
    $region23: #{forward.1} parent=1 // pred_check_branch
      %59 = sbr.rel (0) target = $region25
    $region24: #{forward.1} parent=1 // pred_region
      %s61 = ssub.s32 4096, 4096
      %62 = vsyncadd [#allocation6], %s61
      %s63 = sshll.u32 [#allocation7], 4
      %s64 = int_to_ptr.vmem [resolvable:$true] %s63
      %69 = dma.hbm_to_vmem [thread:$0]  %s5, 4096, %s64, [#allocation6], 256, 256, 16
    $region25: #{forward.1} parent=1 // pred_fallthru
      _
    // Predicated region
    $region26: #{forward.1} parent=1 // pred_check
      _
    $region27: #{forward.1} parent=1 // pred_check_branch
      %71 = sbr.rel (0) target = $region29
    $region28: #{forward.1} parent=1 // pred_region
      %s73 = ssub.s32 8192, 8192
      %74 = vsyncadd [#allocation9], %s73
      %s75 = sshll.u32 [#allocation8], 4
      %s76 = int_to_ptr.vmem [resolvable:$true] %s75
      %81 = dma.hbm_to_vmem [thread:$0]  %s6, 8192, %s76, [#allocation9], 256, 256, 16
    $region29: #{forward.1} parent=1 // pred_fallthru
      _
    // Predicated region
    $region30: #{forward.1} parent=1 // pred_check
      _
    $region31: #{forward.1} parent=1 // pred_check_branch
      %83 = sbr.rel (0) target = $region33
    $region32: #{forward.1} parent=1 // pred_region
      %s85 = ssub.s32 4096, 4096
      %86 = vsyncadd [#allocation9], %s85
      %s87 = sshll.u32 [#allocation10], 4
      %s88 = int_to_ptr.vmem [resolvable:$true] %s87
      %93 = dma.hbm_to_vmem [thread:$0]  %s7, 4096, %s88, [#allocation9], 256, 256, 16
    $region33: #{forward.1} parent=1 // pred_fallthru
      _
    // Predicated region
    $region34: #{forward.1} parent=1 // pred_check
      _
    $region35: #{forward.1} parent=1 // pred_check_branch
      %95 = sbr.rel (0) target = $region37
    $region36: #{forward.1} parent=1 // pred_region
      %s97 = ssub.s32 4096, 4096
      %98 = vsyncadd [#allocation12], %s97
      %s99 = sshll.u32 [#allocation11], 4
      %s100 = int_to_ptr.vmem [resolvable:$true] %s99
      %105 = dma.hbm_to_vmem [thread:$0]  %s8, 4096, %s100, [#allocation12], 256, 256, 16
    $region37: #{forward.1} parent=1 // pred_fallthru
      _
    // Predicated region
    $region38: #{forward.1} parent=1 // pred_check
      _
    $region39: #{forward.1} parent=1 // pred_check_branch
      %107 = sbr.rel (0) target = $region41
    $region40: #{forward.1} parent=1 // pred_region
      %108 = dma.done [#allocation3], 1024
    $region41: #{forward.1} parent=1 // pred_fallthru
      _
    // Predicated region
    $region42: #{forward.1} parent=1 // pred_check
      _
    $region43: #{forward.1} parent=1 // pred_check_branch
      %110 = sbr.rel (0) target = $region45
    $region44: #{forward.1} parent=1 // pred_region
      %111 = dma.done [#allocation6], 256
    $region45: #{forward.1} parent=1 // pred_fallthru
      _
    // Predicated region
    $region46: #{forward.1} parent=1 // pred_check
      _
    $region47: #{forward.1} parent=1 // pred_check_branch
      %113 = sbr.rel (0) target = $region49
    $region48: #{forward.1} parent=1 // pred_region
      %114 = dma.done [#allocation6], 4096
    $region49: #{forward.1} parent=1 // pred_fallthru
      _
    // Predicated region
    $region50: #{forward.1} parent=1 // pred_check
      _
    $region51: #{forward.1} parent=1 // pred_check_branch
      %116 = sbr.rel (0) target = $region53
    $region52: #{forward.1} parent=1 // pred_region
      %117 = dma.done [#allocation9], 8192
    $region53: #{forward.1} parent=1 // pred_fallthru
      _
    // Predicated region
    $region54: #{forward.1} parent=1 // pred_check
      _
    $region55: #{forward.1} parent=1 // pred_check_branch
      %119 = sbr.rel (0) target = $region57
    $region56: #{forward.1} parent=1 // pred_region
      %120 = dma.done [#allocation9], 4096
    $region57: #{forward.1} parent=1 // pred_fallthru
      _
    // Predicated region
    $region58: #{forward.1} parent=1 // pred_check
      _
    $region59: #{forward.1} parent=1 // pred_check_branch
      %122 = sbr.rel (0) target = $region61
    $region60: #{forward.1} parent=1 // pred_region
      %123 = dma.done [#allocation12], 4096
    $region61: #{forward.1} parent=1 // pred_fallthru
      _
    %v124 = vld [vmem:[#allocation5] sm:$0xff]
    %v125 = vld [vmem:[#allocation5 + $0x8] sm:$0xff]
    %v126 = vld [vmem:[%s0] sm:$0xff]
    %v127 = vld [vmem:[%s0 + $0x8] sm:$0xff]
    %v128 = vld [vmem:[%s0 + $0x10] sm:$0xff]
    %v129 = vld [vmem:[%s0 + $0x18] sm:$0xff]
    %v130 = vld [vmem:[%s0 + $0x20] sm:$0xff]
    %v131 = vld [vmem:[%s0 + $0x28] sm:$0xff]
    %v132 = vld [vmem:[%s0 + $0x30] sm:$0xff]
    %v133 = vld [vmem:[%s0 + $0x38] sm:$0xff]
    %v134 = vrot.slane %v126, 4
    %v135 = vadd.f32 %v126, %v134
    %v136 = vrot.slane %v135, 2
    %v137 = vadd.f32 %v135, %v136
    %v138 = vrot.slane %v137, 1
    %v139 = vadd.f32 %v137, %v138
    %v140 = vrot.slane %v127, 4
    %v141 = vadd.f32 %v127, %v140
    %v142 = vrot.slane %v141, 2
    %v143 = vadd.f32 %v141, %v142
    %v144 = vrot.slane %v143, 1
    %v145 = vadd.f32 %v143, %v144
    %v146 = vrot.slane %v128, 4
    %v147 = vadd.f32 %v128, %v146
    %v148 = vrot.slane %v147, 2
    %v149 = vadd.f32 %v147, %v148
    %v150 = vrot.slane %v149, 1
    %v151 = vadd.f32 %v149, %v150
    %v152 = vrot.slane %v129, 4
    %v153 = vadd.f32 %v129, %v152
    %v154 = vrot.slane %v153, 2
    %v155 = vadd.f32 %v153, %v154
    %v156 = vrot.slane %v155, 1
    %v157 = vadd.f32 %v155, %v156
    %v158 = vrot.slane %v130, 4
    %v159 = vadd.f32 %v130, %v158
    %v160 = vrot.slane %v159, 2
    %v161 = vadd.f32 %v159, %v160
    %v162 = vrot.slane %v161, 1
    %v163 = vadd.f32 %v161, %v162
    %v164 = vrot.slane %v131, 4
    %v165 = vadd.f32 %v131, %v164
    %v166 = vrot.slane %v165, 2
    %v167 = vadd.f32 %v165, %v166
    %v168 = vrot.slane %v167, 1
    %v169 = vadd.f32 %v167, %v168
    %v170 = vrot.slane %v132, 4
    %v171 = vadd.f32 %v132, %v170
    %v172 = vrot.slane %v171, 2
    %v173 = vadd.f32 %v171, %v172
    %v174 = vrot.slane %v173, 1
    %v175 = vadd.f32 %v173, %v174
    %v176 = vrot.slane %v133, 4
    %v177 = vadd.f32 %v133, %v176
    %v178 = vrot.slane %v177, 2
    %v179 = vadd.f32 %v177, %v178
    %v180 = vrot.slane %v179, 1
    %v181 = vadd.f32 %v179, %v180
    %v182 = vmul.f32 %v139, 0.125
    %v183 = vmul.f32 %v145, 0.125
    %v184 = vmul.f32 %v151, 0.125
    %v185 = vmul.f32 %v157, 0.125
    %v186 = vmul.f32 %v163, 0.125
    %v187 = vmul.f32 %v169, 0.125
    %v188 = vmul.f32 %v175, 0.125
    %v189 = vmul.f32 %v181, 0.125
    %v190 = vld [vmem:[#allocation2] sm:$0xff]
    %v191 = vld [vmem:[#allocation2 + $0x8] sm:$0xff]
    %v192 = vld [vmem:[#allocation2 + $0x10] sm:$0xff]
    %v193 = vld [vmem:[#allocation2 + $0x18] sm:$0xff]
    %v194 = vld [vmem:[#allocation2 + $0x20] sm:$0xff]
    %v195 = vld [vmem:[#allocation2 + $0x28] sm:$0xff]
    %v196 = vld [vmem:[#allocation2 + $0x30] sm:$0xff]
    %v197 = vld [vmem:[#allocation2 + $0x38] sm:$0xff]
    %v198 = vrot.slane %v190, 4
    %v199 = vadd.f32 %v190, %v198
    %v200 = vrot.slane %v199, 2
    %v201 = vadd.f32 %v199, %v200
    %v202 = vrot.slane %v201, 1
    %v203 = vadd.f32 %v201, %v202
    %v204 = vrot.slane %v191, 4
    %v205 = vadd.f32 %v191, %v204
    %v206 = vrot.slane %v205, 2
    %v207 = vadd.f32 %v205, %v206
    %v208 = vrot.slane %v207, 1
    %v209 = vadd.f32 %v207, %v208
    %v210 = vrot.slane %v192, 4
    %v211 = vadd.f32 %v192, %v210
    %v212 = vrot.slane %v211, 2
    %v213 = vadd.f32 %v211, %v212
    %v214 = vrot.slane %v213, 1
    %v215 = vadd.f32 %v213, %v214
    %v216 = vrot.slane %v193, 4
    %v217 = vadd.f32 %v193, %v216
    %v218 = vrot.slane %v217, 2
    %v219 = vadd.f32 %v217, %v218
    %v220 = vrot.slane %v219, 1
    %v221 = vadd.f32 %v219, %v220
    %v222 = vrot.slane %v194, 4
    %v223 = vadd.f32 %v194, %v222
    %v224 = vrot.slane %v223, 2
    %v225 = vadd.f32 %v223, %v224
    %v226 = vrot.slane %v225, 1
    %v227 = vadd.f32 %v225, %v226
    %v228 = vrot.slane %v195, 4
    %v229 = vadd.f32 %v195, %v228
    %v230 = vrot.slane %v229, 2
    %v231 = vadd.f32 %v229, %v230
    %v232 = vrot.slane %v231, 1
    %v233 = vadd.f32 %v231, %v232
    %v234 = vrot.slane %v196, 4
    %v235 = vadd.f32 %v196, %v234
    %v236 = vrot.slane %v235, 2
    %v237 = vadd.f32 %v235, %v236
    %v238 = vrot.slane %v237, 1
    %v239 = vadd.f32 %v237, %v238
    %v240 = vrot.slane %v197, 4
    %v241 = vadd.f32 %v197, %v240
    %v242 = vrot.slane %v241, 2
    %v243 = vadd.f32 %v241, %v242
    %v244 = vrot.slane %v243, 1
    %v245 = vadd.f32 %v243, %v244
    %v246 = vmul.f32 %v203, 0.125
    %v247 = vmul.f32 %v209, 0.125
    %v248 = vmul.f32 %v215, 0.125
    %v249 = vmul.f32 %v221, 0.125
    %v250 = vmul.f32 %v227, 0.125
    %v251 = vmul.f32 %v233, 0.125
    %v252 = vmul.f32 %v239, 0.125
    %v253 = vmul.f32 %v245, 0.125
    %vm262 = vcmask 1041409
    %v263 = vsel %vm262, %v183, %v182
    %vm264 = vcmask 1042434
    %v265 = vsel %vm264, %v184, %v263
    %vm266 = vcmask 1043459
    %v267 = vsel %vm266, %v185, %v265
    %vm268 = vcmask 1044484
    %v269 = vsel %vm268, %v186, %v267
    %vm270 = vcmask 1045509
    %v271 = vsel %vm270, %v187, %v269
    %vm272 = vcmask 1046534
    %v273 = vsel %vm272, %v188, %v271
    %vm274 = vcmask 1047559
    %v275 = vsel %vm274, %v189, %v273
    %277 = vadd.xlane.f32.xlu0 %v275
    %v278 = vpop.xlane.xlu0 %277
    %v279 = vrcp.pop 128.0
    %v280 = vmul.f32 %v278, %v279
    %v281 = vmul.f32 %v182, %v182
    %v282 = vmul.f32 %v183, %v183
    %v283 = vmul.f32 %v184, %v184
    %v284 = vmul.f32 %v185, %v185
    %v285 = vmul.f32 %v186, %v186
    %v286 = vmul.f32 %v187, %v187
    %v287 = vmul.f32 %v188, %v188
    %v288 = vmul.f32 %v189, %v189
    %v297 = vsel %vm262, %v282, %v281
    %v298 = vsel %vm264, %v283, %v297
    %v299 = vsel %vm266, %v284, %v298
    %v300 = vsel %vm268, %v285, %v299
    %v301 = vsel %vm270, %v286, %v300
    %v302 = vsel %vm272, %v287, %v301
    %v303 = vsel %vm274, %v288, %v302
    %305 = vadd.xlane.f32.xlu0 %v303
    %v306 = vpop.xlane.xlu0 %305
    %v307 = vmul.f32 %v306, %v279
    %v308 = vmul.f32 %v280, %v280
    %v309 = vsub.f32 %v307, %v308
    %v310 = vmax.f32 %v309, 0.0
    %v312 = vrot.slane %v280, 1
    %v313 = vrot.slane %v280, 2
    %v314 = vrot.slane %v280, 3
    %v315 = vrot.slane %v280, 4
    %v316 = vrot.slane %v280, 5
    %v317 = vrot.slane %v280, 6
    %v318 = vrot.slane %v280, 7
    %v327 = vsub.f32 %v182, %v280
    %v328 = vsub.f32 %v183, %v312
    %v329 = vsub.f32 %v184, %v313
    %v330 = vsub.f32 %v185, %v314
    %v331 = vsub.f32 %v186, %v315
    %v332 = vsub.f32 %v187, %v316
    %v333 = vsub.f32 %v188, %v317
    %v334 = vsub.f32 %v189, %v318
    %v335 = vadd.f32 %v310, 1e-05
    %v336 = vrsqrt.pop %v335
    %v338 = vrot.slane %v336, 1
    %v339 = vrot.slane %v336, 2
    %v340 = vrot.slane %v336, 3
    %v341 = vrot.slane %v336, 4
    %v342 = vrot.slane %v336, 5
    %v343 = vrot.slane %v336, 6
    %v344 = vrot.slane %v336, 7
    %v353 = vmul.f32 %v327, %v336
    %v354 = vmul.f32 %v328, %v338
    %v355 = vmul.f32 %v329, %v339
    %v356 = vmul.f32 %v330, %v340
    %v357 = vmul.f32 %v331, %v341
    %v358 = vmul.f32 %v332, %v342
    %v359 = vmul.f32 %v333, %v343
    %v360 = vmul.f32 %v334, %v344
    %v361 = vlaneseq
    %v362 = vshrl.u32 %v361, 7
    %v363 = vsub.s32 0, %v362
    %v364 = vrot.slane %v124, %v363
    %v365 = vmul.f32 %v353, %v364
    %v366 = vmul.f32 %v354, %v364
    %v367 = vmul.f32 %v355, %v364
    %v368 = vmul.f32 %v356, %v364
    %v369 = vmul.f32 %v357, %v364
    %v370 = vmul.f32 %v358, %v364
    %v371 = vmul.f32 %v359, %v364
    %v372 = vmul.f32 %v360, %v364
    %v373 = vlaneseq
    %v374 = vshrl.u32 %v373, 7
    %v375 = vsub.s32 1, %v374
    %v376 = vrot.slane %v124, %v375
    %v377 = vadd.f32 %v365, %v376
    %v378 = vadd.f32 %v366, %v376
    %v379 = vadd.f32 %v367, %v376
    %v380 = vadd.f32 %v368, %v376
    %v381 = vadd.f32 %v369, %v376
    %v382 = vadd.f32 %v370, %v376
    %v383 = vadd.f32 %v371, %v376
    %v384 = vadd.f32 %v372, %v376
    %v385 = vmax.f32 %v377, 0.0
    %v386 = vmax.f32 %v378, 0.0
    %v387 = vmax.f32 %v379, 0.0
    %v388 = vmax.f32 %v380, 0.0
    %v389 = vmax.f32 %v381, 0.0
    %v390 = vmax.f32 %v382, 0.0
    %v391 = vmax.f32 %v383, 0.0
    %v392 = vmax.f32 %v384, 0.0
    %v401 = vsel %vm262, %v247, %v246
    %v402 = vsel %vm264, %v248, %v401
    %v403 = vsel %vm266, %v249, %v402
    %v404 = vsel %vm268, %v250, %v403
    %v405 = vsel %vm270, %v251, %v404
    %v406 = vsel %vm272, %v252, %v405
    %v407 = vsel %vm274, %v253, %v406
    %409 = vadd.xlane.f32.xlu0 %v407
    %v410 = vpop.xlane.xlu0 %409
    %v411 = vmul.f32 %v410, %v279
    %v412 = vmul.f32 %v246, %v246
    %v413 = vmul.f32 %v247, %v247
    %v414 = vmul.f32 %v248, %v248
    %v415 = vmul.f32 %v249, %v249
    %v416 = vmul.f32 %v250, %v250
    %v417 = vmul.f32 %v251, %v251
    %v418 = vmul.f32 %v252, %v252
    %v419 = vmul.f32 %v253, %v253
    %v428 = vsel %vm262, %v413, %v412
    %v429 = vsel %vm264, %v414, %v428
    %v430 = vsel %vm266, %v415, %v429
    %v431 = vsel %vm268, %v416, %v430
    %v432 = vsel %vm270, %v417, %v431
    %v433 = vsel %vm272, %v418, %v432
    %v434 = vsel %vm274, %v419, %v433
    %436 = vadd.xlane.f32.xlu0 %v434
    %v437 = vpop.xlane.xlu0 %436
    %v438 = vmul.f32 %v437, %v279
    %v439 = vmul.f32 %v411, %v411
    %v440 = vsub.f32 %v438, %v439
    %v441 = vmax.f32 %v440, 0.0
    %v443 = vrot.slane %v411, 1
    %v444 = vrot.slane %v411, 2
    %v445 = vrot.slane %v411, 3
    %v446 = vrot.slane %v411, 4
    %v447 = vrot.slane %v411, 5
    %v448 = vrot.slane %v411, 6
    %v449 = vrot.slane %v411, 7
    %v458 = vsub.f32 %v246, %v411
    %v459 = vsub.f32 %v247, %v443
    %v460 = vsub.f32 %v248, %v444
    %v461 = vsub.f32 %v249, %v445
    %v462 = vsub.f32 %v250, %v446
    %v463 = vsub.f32 %v251, %v447
    %v464 = vsub.f32 %v252, %v448
    %v465 = vsub.f32 %v253, %v449
    %v466 = vadd.f32 %v441, 1e-05
    %v467 = vrsqrt.pop %v466
    %v469 = vrot.slane %v467, 1
    %v470 = vrot.slane %v467, 2
    %v471 = vrot.slane %v467, 3
    %v472 = vrot.slane %v467, 4
    %v473 = vrot.slane %v467, 5
    %v474 = vrot.slane %v467, 6
    %v475 = vrot.slane %v467, 7
    %v484 = vmul.f32 %v458, %v467
    %v485 = vmul.f32 %v459, %v469
    %v486 = vmul.f32 %v460, %v470
    %v487 = vmul.f32 %v461, %v471
    %v488 = vmul.f32 %v462, %v472
    %v489 = vmul.f32 %v463, %v473
    %v490 = vmul.f32 %v464, %v474
    %v491 = vmul.f32 %v465, %v475
    %v492 = vlaneseq
    %v493 = vshrl.u32 %v492, 7
    %v494 = vsub.s32 3, %v493
    %v495 = vrot.slane %v124, %v494
    %v496 = vmul.f32 %v484, %v495
    %v497 = vmul.f32 %v485, %v495
    %v498 = vmul.f32 %v486, %v495
    %v499 = vmul.f32 %v487, %v495
    %v500 = vmul.f32 %v488, %v495
    %v501 = vmul.f32 %v489, %v495
    %v502 = vmul.f32 %v490, %v495
    %v503 = vmul.f32 %v491, %v495
    %v504 = vlaneseq
    %v505 = vshrl.u32 %v504, 7
    %v506 = vsub.s32 4, %v505
    %v507 = vrot.slane %v124, %v506
    %v508 = vadd.f32 %v496, %v507
    %v509 = vadd.f32 %v497, %v507
    %v510 = vadd.f32 %v498, %v507
    %v511 = vadd.f32 %v499, %v507
    %v512 = vadd.f32 %v500, %v507
    %v513 = vadd.f32 %v501, %v507
    %v514 = vadd.f32 %v502, %v507
    %v515 = vadd.f32 %v503, %v507
    %v516 = vmax.f32 %v508, 0.0
    %v517 = vmax.f32 %v509, 0.0
    %v518 = vmax.f32 %v510, 0.0
    %v519 = vmax.f32 %v511, 0.0
    %v520 = vmax.f32 %v512, 0.0
    %v521 = vmax.f32 %v513, 0.0
    %v522 = vmax.f32 %v514, 0.0
    %v523 = vmax.f32 %v515, 0.0
    %v532 = vrot.slane %v386, 7
    %v533 = vsel %vm262, %v532, %v385
    %v534 = vrot.slane %v387, 6
    %v535 = vsel %vm264, %v534, %v533
    %v536 = vrot.slane %v388, 5
    %v537 = vsel %vm266, %v536, %v535
    %v538 = vrot.slane %v389, 4
    %v539 = vsel %vm268, %v538, %v537
    %v540 = vrot.slane %v390, 3
    %v541 = vsel %vm270, %v540, %v539
    %v542 = vrot.slane %v391, 2
    %v543 = vsel %vm272, %v542, %v541
    %v544 = vrot.slane %v392, 1
    %v545 = vsel %vm274, %v544, %v543
    %v555 = vrot.slane %v517, 7
    %v556 = vsel %vm262, %v555, %v516
    %v557 = vrot.slane %v518, 6
    %v558 = vsel %vm264, %v557, %v556
    %v559 = vrot.slane %v519, 5
    %v560 = vsel %vm266, %v559, %v558
    %v561 = vrot.slane %v520, 4
    %v562 = vsel %vm268, %v561, %v560
    %v563 = vrot.slane %v521, 3
    %v564 = vsel %vm270, %v563, %v562
    %v565 = vrot.slane %v522, 2
    %v566 = vsel %vm272, %v565, %v564
    %v567 = vrot.slane %v523, 1
    %v568 = vsel %vm274, %v567, %v566
    %v570 = vld [vmem:[#allocation7] sm:$0xff]
    %v571 = vld [vmem:[#allocation7 + $0x8] sm:$0xff]
    %v572 = vld [vmem:[#allocation7 + $0x10] sm:$0xff]
    %v573 = vld [vmem:[#allocation7 + $0x18] sm:$0xff]
    %v574 = vld [vmem:[#allocation7 + $0x20] sm:$0xff]
    %v575 = vld [vmem:[#allocation7 + $0x28] sm:$0xff]
    %v576 = vld [vmem:[#allocation7 + $0x30] sm:$0xff]
    %v577 = vld [vmem:[#allocation7 + $0x38] sm:$0xff]
    %v578 = vld [vmem:[#allocation7 + $0x40] sm:$0xff]
    %v579 = vld [vmem:[#allocation7 + $0x48] sm:$0xff]
    %v580 = vld [vmem:[#allocation7 + $0x50] sm:$0xff]
    %v581 = vld [vmem:[#allocation7 + $0x58] sm:$0xff]
    %v582 = vld [vmem:[#allocation7 + $0x60] sm:$0xff]
    %v583 = vld [vmem:[#allocation7 + $0x68] sm:$0xff]
    %v584 = vld [vmem:[#allocation7 + $0x70] sm:$0xff]
    %v585 = vld [vmem:[#allocation7 + $0x78] sm:$0xff]
    %v586 = vld [vmem:[#allocation7 + $0x80] sm:$0xff]
    %v587 = vld [vmem:[#allocation7 + $0x88] sm:$0xff]
    %v588 = vld [vmem:[#allocation7 + $0x90] sm:$0xff]
    %v589 = vld [vmem:[#allocation7 + $0x98] sm:$0xff]
    %v590 = vld [vmem:[#allocation7 + $0xa0] sm:$0xff]
    %v591 = vld [vmem:[#allocation7 + $0xa8] sm:$0xff]
    %v592 = vld [vmem:[#allocation7 + $0xb0] sm:$0xff]
    %v593 = vld [vmem:[#allocation7 + $0xb8] sm:$0xff]
    %v594 = vld [vmem:[#allocation7 + $0xc0] sm:$0xff]
    %v595 = vld [vmem:[#allocation7 + $0xc8] sm:$0xff]
    %v596 = vld [vmem:[#allocation7 + $0xd0] sm:$0xff]
    %v597 = vld [vmem:[#allocation7 + $0xd8] sm:$0xff]
    %v598 = vld [vmem:[#allocation7 + $0xe0] sm:$0xff]
    %v599 = vld [vmem:[#allocation7 + $0xe8] sm:$0xff]
    %v600 = vld [vmem:[#allocation7 + $0xf0] sm:$0xff]
    %v601 = vld [vmem:[#allocation7 + $0xf8] sm:$0xff]
    %602 = vmatprep.subr.mxu0 %v601
    %603 = vmatpush1.msra.mxu0 %v600
    %604 = vmatprep.subr.mxu0 %v599
    %605 = vmatpush1.msra.mxu0 %v598
    %606 = vmatprep.subr.mxu0 %v597
    %607 = vmatpush1.msra.mxu0 %v596
    %608 = vmatprep.subr.mxu0 %v595
    %609 = vmatpush1.msra.mxu0 %v594
    %610 = vmatprep.subr.mxu0 %v593
    %611 = vmatpush1.msra.mxu0 %v592
    %612 = vmatprep.subr.mxu0 %v591
    %613 = vmatpush1.msra.mxu0 %v590
    %614 = vmatprep.subr.mxu0 %v589
    %615 = vmatpush1.msra.mxu0 %v588
    %616 = vmatprep.subr.mxu0 %v587
    %617 = vmatpush1.msra.mxu0 %v586
    %618 = vmatprep.subr.mxu0 %v585
    %619 = vmatpush1.msra.mxu0 %v584
    %620 = vmatprep.subr.mxu0 %v583
    %621 = vmatpush1.msra.mxu0 %v582
    %622 = vmatprep.subr.mxu0 %v581
    %623 = vmatpush1.msra.mxu0 %v580
    %624 = vmatprep.subr.mxu0 %v579
    %625 = vmatpush1.msra.mxu0 %v578
    %626 = vmatprep.subr.mxu0 %v577
    %627 = vmatpush1.msra.mxu0 %v576
    %628 = vmatprep.subr.mxu0 %v575
    %629 = vmatpush1.msra.mxu0 %v574
    %630 = vmatprep.subr.mxu0 %v573
    %631 = vmatpush1.msra.mxu0 %v572
    %632 = vmatprep.subr.mxu0 %v571
    %633 = vmatpush1.msra.mxu0 %v570
    %634 = vmatprep.subr.mxu0 0.0
    %635 = vmatpush2.msra.mxu0 0.0
    %636 = vmatprep.subr.mxu0 0.0
    %637 = vmatpush2.msra.mxu0 0.0
    %638 = vmatprep.subr.mxu0 0.0
    %639 = vmatpush2.msra.mxu0 0.0
    %640 = vmatprep.subr.mxu0 0.0
    %641 = vmatpush2.msra.mxu0 0.0
    %642 = vmatprep.subr.mxu0 0.0
    %643 = vmatpush2.msra.mxu0 0.0
    %644 = vmatprep.subr.mxu0 0.0
    %645 = vmatpush2.msra.mxu0 0.0
    %646 = vmatprep.subr.mxu0 0.0
    %647 = vmatpush2.msra.mxu0 0.0
    %648 = vmatprep.subr.mxu0 0.0
    %649 = vmatpush2.msra.mxu0 0.0
    %650 = vmatprep.subr.mxu0 0.0
    %651 = vmatpush2.msra.mxu0 0.0
    %652 = vmatprep.subr.mxu0 0.0
    %653 = vmatpush2.msra.mxu0 0.0
    %654 = vmatprep.subr.mxu0 0.0
    %655 = vmatpush2.msra.mxu0 0.0
    %656 = vmatprep.subr.mxu0 0.0
    %657 = vmatpush2.msra.mxu0 0.0
    %658 = vmatprep.subr.mxu0 0.0
    %659 = vmatpush2.msra.mxu0 0.0
    %660 = vmatprep.subr.mxu0 0.0
    %661 = vmatpush2.msra.mxu0 0.0
    %662 = vmatprep.subr.mxu0 0.0
    %663 = vmatpush2.msra.mxu0 0.0
    %664 = vmatprep.subr.mxu0 0.0
    %665 = vmatpush2.msra.mxu0 0.0
    %666 = vmatprep.mubr.f32.mxu0 0.0
    %667 = vmatmul.mubr.f32.gmra.mxu0 %v545
    %v668 = vpop.f32.mrf.mxu0
    %v669 = vadd.f32 0.0, %v668
    %v670 = vpop.f32.mrf.mxu0
    %671 = vmatprep.mubr.f32.mxu0 0.0
    %672 = vmatmul.mubr.f32.gmra.mxu0 %v568
    %v673 = vpop.f32.mrf.mxu0
    %v674 = vpop.f32.mrf.mxu0
    %v675 = vadd.f32 0.0, %v674
    %676 = vdwg.mxu0
    %v677 = vlaneseq
    %v678 = vshrl.u32 %v677, 7
    %v679 = vsub.s32 2, %v678
    %v680 = vrot.slane %v124, %v679
    %v681 = vadd.f32 %v669, %v680
    %v682 = vlaneseq
    %v683 = vshrl.u32 %v682, 7
    %v684 = vsub.s32 5, %v683
    %v685 = vrot.slane %v124, %v684
    %v686 = vadd.f32 %v675, %v685
    %v687 = vld [vmem:[%s2] sm:$0xff]
    %v688 = vld [vmem:[%s2 + $0x8] sm:$0xff]
    %v689 = vld [vmem:[%s3] sm:$0xff]
    %v690 = vld [vmem:[%s3 + $0x8] sm:$0xff]
    %v691 = vld [vmem:[#allocation8] sm:$0xff]
    %v692 = vld [vmem:[#allocation8 + $0x8] sm:$0xff]
    %v693 = vld [vmem:[#allocation8 + $0x10] sm:$0xff]
    %v694 = vld [vmem:[#allocation8 + $0x18] sm:$0xff]
    %v695 = vld [vmem:[#allocation8 + $0x20] sm:$0xff]
    %v696 = vld [vmem:[#allocation8 + $0x28] sm:$0xff]
    %v697 = vld [vmem:[#allocation8 + $0x30] sm:$0xff]
    %v698 = vld [vmem:[#allocation8 + $0x38] sm:$0xff]
    %v699 = vld [vmem:[#allocation8 + $0x40] sm:$0xff]
    %v700 = vld [vmem:[#allocation8 + $0x48] sm:$0xff]
    %v701 = vld [vmem:[#allocation8 + $0x50] sm:$0xff]
    %v702 = vld [vmem:[#allocation8 + $0x58] sm:$0xff]
    %v703 = vld [vmem:[#allocation8 + $0x60] sm:$0xff]
    %v704 = vld [vmem:[#allocation8 + $0x68] sm:$0xff]
    %v705 = vld [vmem:[#allocation8 + $0x70] sm:$0xff]
    %v706 = vld [vmem:[#allocation8 + $0x78] sm:$0xff]
    %v707 = vld [vmem:[#allocation8 + $0x80] sm:$0xff]
    %v708 = vld [vmem:[#allocation8 + $0x88] sm:$0xff]
    %v709 = vld [vmem:[#allocation8 + $0x90] sm:$0xff]
    %v710 = vld [vmem:[#allocation8 + $0x98] sm:$0xff]
    %v711 = vld [vmem:[#allocation8 + $0xa0] sm:$0xff]
    %v712 = vld [vmem:[#allocation8 + $0xa8] sm:$0xff]
    %v713 = vld [vmem:[#allocation8 + $0xb0] sm:$0xff]
    %v714 = vld [vmem:[#allocation8 + $0xb8] sm:$0xff]
    %v715 = vld [vmem:[#allocation8 + $0xc0] sm:$0xff]
    %v716 = vld [vmem:[#allocation8 + $0xc8] sm:$0xff]
    %v717 = vld [vmem:[#allocation8 + $0xd0] sm:$0xff]
    %v718 = vld [vmem:[#allocation8 + $0xd8] sm:$0xff]
    %v719 = vld [vmem:[#allocation8 + $0xe0] sm:$0xff]
    %v720 = vld [vmem:[#allocation8 + $0xe8] sm:$0xff]
    %v721 = vld [vmem:[#allocation8 + $0xf0] sm:$0xff]
    %v722 = vld [vmem:[#allocation8 + $0xf8] sm:$0xff]
    %v723 = vld [vmem:[#allocation8 + $0x100] sm:$0xff]
    %v724 = vld [vmem:[#allocation8 + $0x108] sm:$0xff]
    %v725 = vld [vmem:[#allocation8 + $0x110] sm:$0xff]
    %v726 = vld [vmem:[#allocation8 + $0x118] sm:$0xff]
    %v727 = vld [vmem:[#allocation8 + $0x120] sm:$0xff]
    %v728 = vld [vmem:[#allocation8 + $0x128] sm:$0xff]
    %v729 = vld [vmem:[#allocation8 + $0x130] sm:$0xff]
    %v730 = vld [vmem:[#allocation8 + $0x138] sm:$0xff]
    %v731 = vld [vmem:[#allocation8 + $0x140] sm:$0xff]
    %v732 = vld [vmem:[#allocation8 + $0x148] sm:$0xff]
    %v733 = vld [vmem:[#allocation8 + $0x150] sm:$0xff]
    %v734 = vld [vmem:[#allocation8 + $0x158] sm:$0xff]
    %v735 = vld [vmem:[#allocation8 + $0x160] sm:$0xff]
    %v736 = vld [vmem:[#allocation8 + $0x168] sm:$0xff]
    %v737 = vld [vmem:[#allocation8 + $0x170] sm:$0xff]
    %v738 = vld [vmem:[#allocation8 + $0x178] sm:$0xff]
    %v739 = vld [vmem:[#allocation8 + $0x180] sm:$0xff]
    %v740 = vld [vmem:[#allocation8 + $0x188] sm:$0xff]
    %v741 = vld [vmem:[#allocation8 + $0x190] sm:$0xff]
    %v742 = vld [vmem:[#allocation8 + $0x198] sm:$0xff]
    %v743 = vld [vmem:[#allocation8 + $0x1a0] sm:$0xff]
    %v744 = vld [vmem:[#allocation8 + $0x1a8] sm:$0xff]
    %v745 = vld [vmem:[#allocation8 + $0x1b0] sm:$0xff]
    %v746 = vld [vmem:[#allocation8 + $0x1b8] sm:$0xff]
    %v747 = vld [vmem:[#allocation8 + $0x1c0] sm:$0xff]
    %v748 = vld [vmem:[#allocation8 + $0x1c8] sm:$0xff]
    %v749 = vld [vmem:[#allocation8 + $0x1d0] sm:$0xff]
    %v750 = vld [vmem:[#allocation8 + $0x1d8] sm:$0xff]
    %v751 = vld [vmem:[#allocation8 + $0x1e0] sm:$0xff]
    %v752 = vld [vmem:[#allocation8 + $0x1e8] sm:$0xff]
    %v753 = vld [vmem:[#allocation8 + $0x1f0] sm:$0xff]
    %v754 = vld [vmem:[#allocation8 + $0x1f8] sm:$0xff]
    %755 = vmatprep.subr.mxu0 %v722
    %756 = vmatpush1.msra.mxu0 %v721
    %757 = vmatprep.subr.mxu0 %v720
    %758 = vmatpush1.msra.mxu0 %v719
    %759 = vmatprep.subr.mxu0 %v718
    %760 = vmatpush1.msra.mxu0 %v717
    %761 = vmatprep.subr.mxu0 %v716
    %762 = vmatpush1.msra.mxu0 %v715
    %763 = vmatprep.subr.mxu0 %v714
    %764 = vmatpush1.msra.mxu0 %v713
    %765 = vmatprep.subr.mxu0 %v712
    %766 = vmatpush1.msra.mxu0 %v711
    %767 = vmatprep.subr.mxu0 %v710
    %768 = vmatpush1.msra.mxu0 %v709
    %769 = vmatprep.subr.mxu0 %v708
    %770 = vmatpush1.msra.mxu0 %v707
    %771 = vmatprep.subr.mxu0 %v706
    %772 = vmatpush1.msra.mxu0 %v705
    %773 = vmatprep.subr.mxu0 %v704
    %774 = vmatpush1.msra.mxu0 %v703
    %775 = vmatprep.subr.mxu0 %v702
    %776 = vmatpush1.msra.mxu0 %v701
    %777 = vmatprep.subr.mxu0 %v700
    %778 = vmatpush1.msra.mxu0 %v699
    %779 = vmatprep.subr.mxu0 %v698
    %780 = vmatpush1.msra.mxu0 %v697
    %781 = vmatprep.subr.mxu0 %v696
    %782 = vmatpush1.msra.mxu0 %v695
    %783 = vmatprep.subr.mxu0 %v694
    %784 = vmatpush1.msra.mxu0 %v693
    %785 = vmatprep.subr.mxu0 %v692
    %786 = vmatpush1.msra.mxu0 %v691
    %787 = vmatprep.subr.mxu0 %v754
    %788 = vmatpush2.msra.mxu0 %v753
    %789 = vmatprep.subr.mxu0 %v752
    %790 = vmatpush2.msra.mxu0 %v751
    %791 = vmatprep.subr.mxu0 %v750
    %792 = vmatpush2.msra.mxu0 %v749
    %793 = vmatprep.subr.mxu0 %v748
    %794 = vmatpush2.msra.mxu0 %v747
    %795 = vmatprep.subr.mxu0 %v746
    %796 = vmatpush2.msra.mxu0 %v745
    %797 = vmatprep.subr.mxu0 %v744
    %798 = vmatpush2.msra.mxu0 %v743
    %799 = vmatprep.subr.mxu0 %v742
    %800 = vmatpush2.msra.mxu0 %v741
    %801 = vmatprep.subr.mxu0 %v740
    %802 = vmatpush2.msra.mxu0 %v739
    %803 = vmatprep.subr.mxu0 %v738
    %804 = vmatpush2.msra.mxu0 %v737
    %805 = vmatprep.subr.mxu0 %v736
    %806 = vmatpush2.msra.mxu0 %v735
    %807 = vmatprep.subr.mxu0 %v734
    %808 = vmatpush2.msra.mxu0 %v733
    %809 = vmatprep.subr.mxu0 %v732
    %810 = vmatpush2.msra.mxu0 %v731
    %811 = vmatprep.subr.mxu0 %v730
    %812 = vmatpush2.msra.mxu0 %v729
    %813 = vmatprep.subr.mxu0 %v728
    %814 = vmatpush2.msra.mxu0 %v727
    %815 = vmatprep.subr.mxu0 %v726
    %816 = vmatpush2.msra.mxu0 %v725
    %817 = vmatprep.subr.mxu0 %v724
    %818 = vmatpush2.msra.mxu0 %v723
    %819 = vmatprep.mubr.f32.mxu0 %v688
    %820 = vmatmul.mubr.f32.gmra.mxu0 %v687
    %v821 = vpop.f32.mrf.mxu0
    %v822 = vadd.f32 0.0, %v821
    %v823 = vpop.f32.mrf.mxu0
    %824 = vmatprep.mubr.f32.mxu0 %v690
    %825 = vmatmul.mubr.f32.gmra.mxu0 %v689
    %v826 = vpop.f32.mrf.mxu0
    %v827 = vpop.f32.mrf.mxu0
    %v828 = vadd.f32 0.0, %v827
    %829 = vdwg.mxu0
    %v830 = vlaneseq
    %v831 = vshrl.u32 %v830, 7
    %v832 = vsub.s32 6, %v831
    %v833 = vrot.slane %v124, %v832
    %v834 = vadd.f32 %v822, %v833
    %v835 = vlaneseq
    %v836 = vshrl.u32 %v835, 7
    %v837 = vsub.s32 7, %v836
    %v838 = vrot.slane %v124, %v837
    %v839 = vadd.f32 %v828, %v838
    %v840 = vadd.f32 %v686, %v681
    %841 = vadd.xlane.f32.xlu0 %v840
    %v842 = vpop.xlane.xlu0 %841
    %v843 = vmul.f32 %v842, %v279
    %v844 = vmul.f32 %v840, %v840
    %845 = vadd.xlane.f32.xlu0 %v844
    %v846 = vpop.xlane.xlu0 %845
    %v847 = vmul.f32 %v846, %v279
    %v848 = vmul.f32 %v843, %v843
    %v849 = vsub.f32 %v847, %v848
    %v850 = vmax.f32 %v849, 0.0
    %v851 = vsub.f32 %v840, %v843
    %v852 = vadd.f32 %v850, 1e-05
    %v853 = vrsqrt.pop %v852
    %v854 = vmul.f32 %v851, %v853
    %v855 = vlaneseq
    %v856 = vshrl.u32 %v855, 7
    %v857 = vsub.s32 0, %v856
    %v858 = vrot.slane %v125, %v857
    %v859 = vmul.f32 %v854, %v858
    %v860 = vlaneseq
    %v861 = vshrl.u32 %v860, 7
    %v862 = vsub.s32 1, %v861
    %v863 = vrot.slane %v125, %v862
    %v864 = vadd.f32 %v859, %v863
    %v865 = vadd.f32 %v834, %v839
    %v866 = vld [vmem:[#allocation10] sm:$0xff]
    %v867 = vld [vmem:[#allocation10 + $0x8] sm:$0xff]
    %v868 = vld [vmem:[#allocation10 + $0x10] sm:$0xff]
    %v869 = vld [vmem:[#allocation10 + $0x18] sm:$0xff]
    %v870 = vld [vmem:[#allocation10 + $0x20] sm:$0xff]
    %v871 = vld [vmem:[#allocation10 + $0x28] sm:$0xff]
    %v872 = vld [vmem:[#allocation10 + $0x30] sm:$0xff]
    %v873 = vld [vmem:[#allocation10 + $0x38] sm:$0xff]
    %v874 = vld [vmem:[#allocation10 + $0x40] sm:$0xff]
    %v875 = vld [vmem:[#allocation10 + $0x48] sm:$0xff]
    %v876 = vld [vmem:[#allocation10 + $0x50] sm:$0xff]
    %v877 = vld [vmem:[#allocation10 + $0x58] sm:$0xff]
    %v878 = vld [vmem:[#allocation10 + $0x60] sm:$0xff]
    %v879 = vld [vmem:[#allocation10 + $0x68] sm:$0xff]
    %v880 = vld [vmem:[#allocation10 + $0x70] sm:$0xff]
    %v881 = vld [vmem:[#allocation10 + $0x78] sm:$0xff]
    %v882 = vld [vmem:[#allocation10 + $0x80] sm:$0xff]
    %v883 = vld [vmem:[#allocation10 + $0x88] sm:$0xff]
    %v884 = vld [vmem:[#allocation10 + $0x90] sm:$0xff]
    %v885 = vld [vmem:[#allocation10 + $0x98] sm:$0xff]
    %v886 = vld [vmem:[#allocation10 + $0xa0] sm:$0xff]
    %v887 = vld [vmem:[#allocation10 + $0xa8] sm:$0xff]
    %v888 = vld [vmem:[#allocation10 + $0xb0] sm:$0xff]
    %v889 = vld [vmem:[#allocation10 + $0xb8] sm:$0xff]
    %v890 = vld [vmem:[#allocation10 + $0xc0] sm:$0xff]
    %v891 = vld [vmem:[#allocation10 + $0xc8] sm:$0xff]
    %v892 = vld [vmem:[#allocation10 + $0xd0] sm:$0xff]
    %v893 = vld [vmem:[#allocation10 + $0xd8] sm:$0xff]
    %v894 = vld [vmem:[#allocation10 + $0xe0] sm:$0xff]
    %v895 = vld [vmem:[#allocation10 + $0xe8] sm:$0xff]
    %v896 = vld [vmem:[#allocation10 + $0xf0] sm:$0xff]
    %v897 = vld [vmem:[#allocation10 + $0xf8] sm:$0xff]
    %898 = vmatprep.subr.mxu0 %v897
    %899 = vmatpush1.msra.mxu0 %v896
    %900 = vmatprep.subr.mxu0 %v895
    %901 = vmatpush1.msra.mxu0 %v894
    %902 = vmatprep.subr.mxu0 %v893
    %903 = vmatpush1.msra.mxu0 %v892
    %904 = vmatprep.subr.mxu0 %v891
    %905 = vmatpush1.msra.mxu0 %v890
    %906 = vmatprep.subr.mxu0 %v889
    %907 = vmatpush1.msra.mxu0 %v888
    %908 = vmatprep.subr.mxu0 %v887
    %909 = vmatpush1.msra.mxu0 %v886
    %910 = vmatprep.subr.mxu0 %v885
    %911 = vmatpush1.msra.mxu0 %v884
    %912 = vmatprep.subr.mxu0 %v883
    %913 = vmatpush1.msra.mxu0 %v882
    %914 = vmatprep.subr.mxu0 %v881
    %915 = vmatpush1.msra.mxu0 %v880
    %916 = vmatprep.subr.mxu0 %v879
    %917 = vmatpush1.msra.mxu0 %v878
    %918 = vmatprep.subr.mxu0 %v877
    %919 = vmatpush1.msra.mxu0 %v876
    %920 = vmatprep.subr.mxu0 %v875
    %921 = vmatpush1.msra.mxu0 %v874
    %922 = vmatprep.subr.mxu0 %v873
    %923 = vmatpush1.msra.mxu0 %v872
    %924 = vmatprep.subr.mxu0 %v871
    %925 = vmatpush1.msra.mxu0 %v870
    %926 = vmatprep.subr.mxu0 %v869
    %927 = vmatpush1.msra.mxu0 %v868
    %928 = vmatprep.subr.mxu0 %v867
    %929 = vmatpush1.msra.mxu0 %v866
    %930 = vmatprep.subr.mxu0 0.0
    %931 = vmatpush2.msra.mxu0 0.0
    %932 = vmatprep.subr.mxu0 0.0
    %933 = vmatpush2.msra.mxu0 0.0
    %934 = vmatprep.subr.mxu0 0.0
    %935 = vmatpush2.msra.mxu0 0.0
    %936 = vmatprep.subr.mxu0 0.0
    %937 = vmatpush2.msra.mxu0 0.0
    %938 = vmatprep.subr.mxu0 0.0
    %939 = vmatpush2.msra.mxu0 0.0
    %940 = vmatprep.subr.mxu0 0.0
    %941 = vmatpush2.msra.mxu0 0.0
    %942 = vmatprep.subr.mxu0 0.0
    %943 = vmatpush2.msra.mxu0 0.0
    %944 = vmatprep.subr.mxu0 0.0
    %945 = vmatpush2.msra.mxu0 0.0
    %946 = vmatprep.subr.mxu0 0.0
    %947 = vmatpush2.msra.mxu0 0.0
    %948 = vmatprep.subr.mxu0 0.0
    %949 = vmatpush2.msra.mxu0 0.0
    %950 = vmatprep.subr.mxu0 0.0
    %951 = vmatpush2.msra.mxu0 0.0
    %952 = vmatprep.subr.mxu0 0.0
    %953 = vmatpush2.msra.mxu0 0.0
    %954 = vmatprep.subr.mxu0 0.0
    %955 = vmatpush2.msra.mxu0 0.0
    %956 = vmatprep.subr.mxu0 0.0
    %957 = vmatpush2.msra.mxu0 0.0
    %958 = vmatprep.subr.mxu0 0.0
    %959 = vmatpush2.msra.mxu0 0.0
    %960 = vmatprep.subr.mxu0 0.0
    %961 = vmatpush2.msra.mxu0 0.0
    %962 = vmatprep.mubr.f32.mxu0 0.0
    %963 = vmatmul.mubr.f32.gmra.mxu0 %v864
    %v964 = vpop.f32.mrf.mxu0
    %v965 = vadd.f32 0.0, %v964
    %v966 = vpop.f32.mrf.mxu0
    %967 = vmatprep.mubr.f32.mxu0 0.0
    %968 = vmatmul.mubr.f32.gmra.mxu0 %v865
    %v969 = vpop.f32.mrf.mxu0
    %v970 = vpop.f32.mrf.mxu0
    %v971 = vadd.f32 0.0, %v970
    %972 = vdwg.mxu0
    %v973 = vlaneseq
    %v974 = vshrl.u32 %v973, 7
    %v975 = vsub.s32 2, %v974
    %v976 = vrot.slane %v125, %v975
    %v977 = vadd.f32 %v965, %v976
    %v978 = vmax.f32 %v977, 0.0
    %v979 = vlaneseq
    %v980 = vshrl.u32 %v979, 7
    %v981 = vsub.s32 4, %v980
    %v982 = vrot.slane %v125, %v981
    %v983 = vadd.f32 %v971, %v982
    %v984 = vlaneseq
    %v985 = vshrl.u32 %v984, 7
    %v986 = vsub.s32 6, %v985
    %v987 = vrot.slane %v125, %v986
    %v988 = vmul.f32 %v983, %v987
    %v989 = vlaneseq
    %v990 = vshrl.u32 %v989, 7
    %v991 = vsub.s32 7, %v990
    %v992 = vrot.slane %v125, %v991
    %v993 = vadd.f32 %v988, %v992
    %v994 = vmax.f32 %v993, 0.0
    %v995 = vld [vmem:[#allocation11] sm:$0xff]
    %v996 = vld [vmem:[#allocation11 + $0x8] sm:$0xff]
    %v997 = vld [vmem:[#allocation11 + $0x10] sm:$0xff]
    %v998 = vld [vmem:[#allocation11 + $0x18] sm:$0xff]
    %v999 = vld [vmem:[#allocation11 + $0x20] sm:$0xff]
    %v1000 = vld [vmem:[#allocation11 + $0x28] sm:$0xff]
    %v1001 = vld [vmem:[#allocation11 + $0x30] sm:$0xff]
    %v1002 = vld [vmem:[#allocation11 + $0x38] sm:$0xff]
    %v1003 = vld [vmem:[#allocation11 + $0x40] sm:$0xff]
    %v1004 = vld [vmem:[#allocation11 + $0x48] sm:$0xff]
    %v1005 = vld [vmem:[#allocation11 + $0x50] sm:$0xff]
    %v1006 = vld [vmem:[#allocation11 + $0x58] sm:$0xff]
    %v1007 = vld [vmem:[#allocation11 + $0x60] sm:$0xff]
    %v1008 = vld [vmem:[#allocation11 + $0x68] sm:$0xff]
    %v1009 = vld [vmem:[#allocation11 + $0x70] sm:$0xff]
    %v1010 = vld [vmem:[#allocation11 + $0x78] sm:$0xff]
    %v1011 = vld [vmem:[#allocation11 + $0x80] sm:$0xff]
    %v1012 = vld [vmem:[#allocation11 + $0x88] sm:$0xff]
    %v1013 = vld [vmem:[#allocation11 + $0x90] sm:$0xff]
    %v1014 = vld [vmem:[#allocation11 + $0x98] sm:$0xff]
    %v1015 = vld [vmem:[#allocation11 + $0xa0] sm:$0xff]
    %v1016 = vld [vmem:[#allocation11 + $0xa8] sm:$0xff]
    %v1017 = vld [vmem:[#allocation11 + $0xb0] sm:$0xff]
    %v1018 = vld [vmem:[#allocation11 + $0xb8] sm:$0xff]
    %v1019 = vld [vmem:[#allocation11 + $0xc0] sm:$0xff]
    %v1020 = vld [vmem:[#allocation11 + $0xc8] sm:$0xff]
    %v1021 = vld [vmem:[#allocation11 + $0xd0] sm:$0xff]
    %v1022 = vld [vmem:[#allocation11 + $0xd8] sm:$0xff]
    %v1023 = vld [vmem:[#allocation11 + $0xe0] sm:$0xff]
    %v1024 = vld [vmem:[#allocation11 + $0xe8] sm:$0xff]
    %v1025 = vld [vmem:[#allocation11 + $0xf0] sm:$0xff]
    %v1026 = vld [vmem:[#allocation11 + $0xf8] sm:$0xff]
    %1027 = vmatprep.subr.mxu0 %v1026
    %1028 = vmatpush1.msra.mxu0 %v1025
    %1029 = vmatprep.subr.mxu0 %v1024
    %1030 = vmatpush1.msra.mxu0 %v1023
    %1031 = vmatprep.subr.mxu0 %v1022
    %1032 = vmatpush1.msra.mxu0 %v1021
    %1033 = vmatprep.subr.mxu0 %v1020
    %1034 = vmatpush1.msra.mxu0 %v1019
    %1035 = vmatprep.subr.mxu0 %v1018
    %1036 = vmatpush1.msra.mxu0 %v1017
    %1037 = vmatprep.subr.mxu0 %v1016
    %1038 = vmatpush1.msra.mxu0 %v1015
    %1039 = vmatprep.subr.mxu0 %v1014
    %1040 = vmatpush1.msra.mxu0 %v1013
    %1041 = vmatprep.subr.mxu0 %v1012
    %1042 = vmatpush1.msra.mxu0 %v1011
    %1043 = vmatprep.subr.mxu0 %v1010
    %1044 = vmatpush1.msra.mxu0 %v1009
    %1045 = vmatprep.subr.mxu0 %v1008
    %1046 = vmatpush1.msra.mxu0 %v1007
    %1047 = vmatprep.subr.mxu0 %v1006
    %1048 = vmatpush1.msra.mxu0 %v1005
    %1049 = vmatprep.subr.mxu0 %v1004
    %1050 = vmatpush1.msra.mxu0 %v1003
    %1051 = vmatprep.subr.mxu0 %v1002
    %1052 = vmatpush1.msra.mxu0 %v1001
    %1053 = vmatprep.subr.mxu0 %v1000
    %1054 = vmatpush1.msra.mxu0 %v999
    %1055 = vmatprep.subr.mxu0 %v998
    %1056 = vmatpush1.msra.mxu0 %v997
    %1057 = vmatprep.subr.mxu0 %v996
    %1058 = vmatpush1.msra.mxu0 %v995
    %1059 = vmatprep.subr.mxu0 0.0
    %1060 = vmatpush2.msra.mxu0 0.0
    %1061 = vmatprep.subr.mxu0 0.0
    %1062 = vmatpush2.msra.mxu0 0.0
    %1063 = vmatprep.subr.mxu0 0.0
    %1064 = vmatpush2.msra.mxu0 0.0
    %1065 = vmatprep.subr.mxu0 0.0
    %1066 = vmatpush2.msra.mxu0 0.0
    %1067 = vmatprep.subr.mxu0 0.0
    %1068 = vmatpush2.msra.mxu0 0.0
    %1069 = vmatprep.subr.mxu0 0.0
    %1070 = vmatpush2.msra.mxu0 0.0
    %1071 = vmatprep.subr.mxu0 0.0
    %1072 = vmatpush2.msra.mxu0 0.0
    %1073 = vmatprep.subr.mxu0 0.0
    %1074 = vmatpush2.msra.mxu0 0.0
    %1075 = vmatprep.subr.mxu0 0.0
    %1076 = vmatpush2.msra.mxu0 0.0
    %1077 = vmatprep.subr.mxu0 0.0
    %1078 = vmatpush2.msra.mxu0 0.0
    %1079 = vmatprep.subr.mxu0 0.0
    %1080 = vmatpush2.msra.mxu0 0.0
    %1081 = vmatprep.subr.mxu0 0.0
    %1082 = vmatpush2.msra.mxu0 0.0
    %1083 = vmatprep.subr.mxu0 0.0
    %1084 = vmatpush2.msra.mxu0 0.0
    %1085 = vmatprep.subr.mxu0 0.0
    %1086 = vmatpush2.msra.mxu0 0.0
    %1087 = vmatprep.subr.mxu0 0.0
    %1088 = vmatpush2.msra.mxu0 0.0
    %1089 = vmatprep.subr.mxu0 0.0
    %1090 = vmatpush2.msra.mxu0 0.0
    %1091 = vmatprep.mubr.f32.mxu0 0.0
    %1092 = vmatmul.mubr.f32.gmra.mxu0 %v978
    %v1093 = vpop.f32.mrf.mxu0
    %v1094 = vadd.f32 0.0, %v1093
    %v1095 = vpop.f32.mrf.mxu0
    %1096 = vmatprep.mubr.f32.mxu0 0.0
    %1097 = vmatmul.mubr.f32.gmra.mxu0 %v994
    %v1098 = vpop.f32.mrf.mxu0
    %v1099 = vpop.f32.mrf.mxu0
    %v1100 = vadd.f32 0.0, %v1099
    %1101 = vdwg.mxu0
    %v1102 = vlaneseq
    %v1103 = vshrl.u32 %v1102, 7
    %v1104 = vsub.s32 3, %v1103
    %v1105 = vrot.slane %v125, %v1104
    %v1106 = vadd.f32 %v1094, %v1105
    %v1107 = vlaneseq
    %v1108 = vshrl.u32 %v1107, 7
    %v1109 = vsub.s32 5, %v1108
    %v1110 = vrot.slane %v125, %v1109
    %v1111 = vadd.f32 %v1100, %v1110
    %v1112 = vmul.f32 %v1111, %v1111
    %1113 = vadd.xlane.f32.xlu0 %v1112
    %v1114 = vpop.xlane.xlu0 %1113
    %v1115 = vmax.f32 %v1114, 1e-24
    %v1116 = vrsqrt.pop %v1115
    %v1117 = vmul.f32 %v1111, %v1116
    %1118 = vst [vmem:[#allocation13] sm:$0xff] %v1117
    %v1119 = vmul.f32 %v1106, %v1106
    %1120 = vadd.xlane.f32.xlu0 %v1119
    %v1121 = vpop.xlane.xlu0 %1120
    %v1122 = vmax.f32 %v1121, 1e-24
    %v1123 = vrsqrt.pop %v1122
    %v1124 = vmul.f32 %v1106, %v1123
    %1125 = vst [vmem:[#allocation14] sm:$0xff] %v1124
    %v1126 = vmul.f32 %v834, %v834
    %1127 = vadd.xlane.f32.xlu0 %v1126
    %v1128 = vpop.xlane.xlu0 %1127
    %v1129 = vmax.f32 %v1128, 1e-24
    %v1130 = vrsqrt.pop %v1129
    %v1131 = vmul.f32 %v834, %v1130
    %1132 = vst [vmem:[#allocation16] sm:$0xff] %v1131
    %v1133 = vmul.f32 %v686, %v686
    %1134 = vadd.xlane.f32.xlu0 %v1133
    %v1135 = vpop.xlane.xlu0 %1134
    %v1136 = vmax.f32 %v1135, 1e-24
    %v1137 = vrsqrt.pop %v1136
    %v1138 = vmul.f32 %v686, %v1137
    %1139 = vst [vmem:[#allocation17] sm:$0xff] %v1138
    %v1140 = vmul.f32 %v839, %v839
    %1141 = vadd.xlane.f32.xlu0 %v1140
    %v1142 = vpop.xlane.xlu0 %1141
    %v1143 = vmax.f32 %v1142, 1e-24
    %v1144 = vrsqrt.pop %v1143
    %v1145 = vmul.f32 %v839, %v1144
    %1146 = vst [vmem:[#allocation19] sm:$0xff] %v1145
    %v1147 = vmul.f32 %v681, %v681
    %1148 = vadd.xlane.f32.xlu0 %v1147
    %v1149 = vpop.xlane.xlu0 %1148
    %v1150 = vmax.f32 %v1149, 1e-24
    %v1151 = vrsqrt.pop %v1150
    %v1152 = vmul.f32 %v681, %v1151
    %1153 = vst [vmem:[#allocation20] sm:$0xff] %v1152
    // Predicated region
    $region62: #{forward.1} parent=1 // pred_check
      _
    $region63: #{forward.1} parent=1 // pred_check_branch
      %1155 = sbr.rel (0) target = $region65
    $region64: #{forward.1} parent=1 // pred_region
      %s1157 = ssub.s32 128, 128
      %1158 = vsyncadd [#allocation4], %s1157
      %s1160 = sshll.u32 [#allocation13], 4
      %s1161 = int_to_ptr.vmem [resolvable:$true] %s1160
      %1163 = dma.vmem_to_hbm [thread:$0]  %s1161, 128, %s9, [#allocation4]
    $region65: #{forward.1} parent=1 // pred_fallthru
      _
    // Predicated region
    $region66: #{forward.1} parent=1 // pred_check
      _
    $region67: #{forward.1} parent=1 // pred_check_branch
      %1165 = sbr.rel (0) target = $region69
    $region68: #{forward.1} parent=1 // pred_region
      %s1167 = ssub.s32 128, 128
      %1168 = vsyncadd [#allocation15], %s1167
      %s1170 = sshll.u32 [#allocation14], 4
      %s1171 = int_to_ptr.vmem [resolvable:$true] %s1170
      %1173 = dma.vmem_to_hbm [thread:$0]  %s1171, 128, %s10, [#allocation15]
    $region69: #{forward.1} parent=1 // pred_fallthru
      _
    // Predicated region
    $region70: #{forward.1} parent=1 // pred_check
      _
    $region71: #{forward.1} parent=1 // pred_check_branch
      %1175 = sbr.rel (0) target = $region73
    $region72: #{forward.1} parent=1 // pred_region
      %s1177 = ssub.s32 128, 128
      %1178 = vsyncadd [#allocation15], %s1177
      %s1180 = sshll.u32 [#allocation16], 4
      %s1181 = int_to_ptr.vmem [resolvable:$true] %s1180
      %1183 = dma.vmem_to_hbm [thread:$0]  %s1181, 128, %s11, [#allocation15]
    $region73: #{forward.1} parent=1 // pred_fallthru
      _
    // Predicated region
    $region74: #{forward.1} parent=1 // pred_check
      _
    $region75: #{forward.1} parent=1 // pred_check_branch
      %1185 = sbr.rel (0) target = $region77
    $region76: #{forward.1} parent=1 // pred_region
      %s1187 = ssub.s32 128, 128
      %1188 = vsyncadd [#allocation18], %s1187
      %s1190 = sshll.u32 [#allocation17], 4
      %s1191 = int_to_ptr.vmem [resolvable:$true] %s1190
      %1193 = dma.vmem_to_hbm [thread:$0]  %s1191, 128, %s12, [#allocation18]
    $region77: #{forward.1} parent=1 // pred_fallthru
      _
    // Predicated region
    $region78: #{forward.1} parent=1 // pred_check
      _
    $region79: #{forward.1} parent=1 // pred_check_branch
      %1195 = sbr.rel (0) target = $region81
    $region80: #{forward.1} parent=1 // pred_region
      %s1197 = ssub.s32 128, 128
      %1198 = vsyncadd [#allocation18], %s1197
      %s1200 = sshll.u32 [#allocation19], 4
      %s1201 = int_to_ptr.vmem [resolvable:$true] %s1200
      %1203 = dma.vmem_to_hbm [thread:$0]  %s1201, 128, %s13, [#allocation18]
    $region81: #{forward.1} parent=1 // pred_fallthru
      _
    // Predicated region
    $region82: #{forward.1} parent=1 // pred_check
      _
    $region83: #{forward.1} parent=1 // pred_check_branch
      %1205 = sbr.rel (0) target = $region85
    $region84: #{forward.1} parent=1 // pred_region
      %s1207 = ssub.s32 128, 128
      %1208 = vsyncadd [#allocation21], %s1207
      %s1210 = sshll.u32 [#allocation20], 4
      %s1211 = int_to_ptr.vmem [resolvable:$true] %s1210
      %1213 = dma.vmem_to_hbm [thread:$0]  %s1211, 128, %s14, [#allocation21]
    $region85: #{forward.1} parent=1 // pred_fallthru
      _
    // Predicated region
    $region86: #{forward.1} parent=1 // pred_check
      _
    $region87: #{forward.1} parent=1 // pred_check_branch
      %1215 = sbr.rel (0) target = $region89
    $region88: #{forward.1} parent=1 // pred_region
      %1216 = dma.done [#allocation4], 128
    $region89: #{forward.1} parent=1 // pred_fallthru
      _
    // Predicated region
    $region90: #{forward.1} parent=1 // pred_check
      _
    $region91: #{forward.1} parent=1 // pred_check_branch
      %1218 = sbr.rel (0) target = $region93
    $region92: #{forward.1} parent=1 // pred_region
      %1219 = dma.done [#allocation15], 128
    $region93: #{forward.1} parent=1 // pred_fallthru
      _
    // Predicated region
    $region94: #{forward.1} parent=1 // pred_check
      _
    $region95: #{forward.1} parent=1 // pred_check_branch
      %1221 = sbr.rel (0) target = $region97
    $region96: #{forward.1} parent=1 // pred_region
      %1222 = dma.done [#allocation15], 128
    $region97: #{forward.1} parent=1 // pred_fallthru
      _
    // Predicated region
    $region98: #{forward.1} parent=1 // pred_check
      _
    $region99: #{forward.1} parent=1 // pred_check_branch
      %1224 = sbr.rel (0) target = $region101
    $region100: #{forward.1} parent=1 // pred_region
      %1225 = dma.done [#allocation18], 128
    $region101: #{forward.1} parent=1 // pred_fallthru
      _
    // Predicated region
    $region102: #{forward.1} parent=1 // pred_check
      _
    $region103: #{forward.1} parent=1 // pred_check_branch
      %1227 = sbr.rel (0) target = $region105
    $region104: #{forward.1} parent=1 // pred_region
      %1228 = dma.done [#allocation18], 128
    $region105: #{forward.1} parent=1 // pred_fallthru
      _
    // Predicated region
    $region106: #{forward.1} parent=1 // pred_check
      _
    $region107: #{forward.1} parent=1 // pred_check_branch
      %1230 = sbr.rel (0) target = $region109
    $region108: #{forward.1} parent=1 // pred_region
      %1231 = dma.done [#allocation21], 128
    $region109: #{forward.1} parent=1 // pred_fallthru
      _
    %1232 = vsyncpa [#allocation3], 1
    %1233 = vsyncpa [#allocation6], 1
    %1234 = vsyncpa [#allocation9], 1
    %1235 = vsyncpa [#allocation12], 1
    %1236 = vsyncpa [#allocation4], 1
    %1237 = vsyncpa [#allocation15], 1
    %1238 = vsyncpa [#allocation18], 1
    %1239 = vsyncpa [#allocation21], 1

</llo_original>
